<compile_context>
chip_gen: v5e
topology: v5e:2x2
jax: 0.10.0
libtpu: 0.0.40
codegen_flags: <defaults>
</compile_context>

<pallas_src>
import jax
import jax.numpy as jnp
from jax import lax
from jax.experimental import pallas as pl
from jax.experimental.pallas import tpu as pltpu


def transition_rotation_kernel(x_ref, wih_ref, whh_ref, b_ref, w_ref, resp_ref,
                               h_out_ref, xwy_out_ref):
    """Single invocation: hoisted projections + statically-unrolled LSTM recurrence."""
    B, T, D = x_ref.shape

    # Constants loaded exactly once; MXU operands in bf16 (f32 matmuls are multi-pass emulation).
    wih = wih_ref[...].astype(jnp.bfloat16)          # (D, 4D)
    whh = whh_ref[...].astype(jnp.bfloat16)          # (D, 4D)
    bias = b_ref[...]                                # (1, 4D) f32

    # ---- Hoisted input projection: one (B*T,D)@(D,4D) matmul + one bias add (not T of each).
    # Reshape done in f32 (sublane dim 8 == native tile) before the bf16 cast.
    x2 = x_ref[...].reshape(B * T, D).astype(jnp.bfloat16)
    x_proj = (jnp.dot(x2, wih, preferred_element_type=jnp.float32)
              + bias).reshape(B, T, 4 * D)           # (B, T, 4D) f32

    # ---- Hoisted bilinear right factor Wr = W @ resp^T (independent of h, overlaps recurrence).
    Wr = lax.dot_general(w_ref[...].astype(jnp.bfloat16),
                         resp_ref[...].astype(jnp.bfloat16),
                         (((1,), (1,)), ((), ())),
                         preferred_element_type=jnp.float32)   # (D, B)
    Wr = Wr.astype(jnp.bfloat16)

    h = jnp.zeros((B, D), jnp.float32)
    c = jnp.zeros((B, D), jnp.float32)

    # Statically unrolled recurrence (T small & known at trace time). PyTorch gate order (i,f,g,o).
    # Only the h @ W_hh matmul remains on the serial critical path.
    for t in range(T):
        gates = x_proj[:, t, :] + jnp.dot(h.astype(jnp.bfloat16), whh,
                                          preferred_element_type=jnp.float32)   # (B, 4D) f32
        sig = jax.nn.sigmoid(gates)    # one EUP pass over the whole gate vreg
        th = jnp.tanh(gates)           # one EUP pass; g sliced out below
        i = sig[:, 0 * D:1 * D]
        f = sig[:, 1 * D:2 * D]
        o = sig[:, 3 * D:4 * D]
        g = th[:, 2 * D:3 * D]
        c = f * c + i * g
        h = o * jnp.tanh(c)

    xwy = jnp.dot(h.astype(jnp.bfloat16), Wr,
                  preferred_element_type=jnp.float32)          # (B, B)

    h_out_ref[...] = jax.nn.sigmoid(h)
    xwy_out_ref[...] = jax.nn.sigmoid(xwy)


def _transition_rotation_impl(dials, response, w_ih_t, w_hh_t, bias, W):
    """dials: (B, T, D) f32 batch-first, response: (B, D) f32. Returns (B, 2*D + B) f32."""
    B, T, D = dials.shape
    assert response.shape == (B, D)

    vmem_spec = pl.BlockSpec(memory_space=pltpu.MemorySpace.VMEM)
    h_sig, xwy_sig = pl.pallas_call(
        transition_rotation_kernel,
        out_shape=(jax.ShapeDtypeStruct((B, D), jnp.float32),
                   jax.ShapeDtypeStruct((B, B), jnp.float32)),
        in_specs=[vmem_spec] * 6,
        out_specs=(vmem_spec, vmem_spec),
    )(dials, w_ih_t, w_hh_t, bias, W, response)

    # sigmoid(response) and the final concat are trivially fused XLA ops in the wrapper.
    return jnp.concatenate([h_sig, xwy_sig, jax.nn.sigmoid(response)], axis=1)


transition_rotation = jax.jit(_transition_rotation_impl)


def reference(dials, response, w_ih_t, w_hh_t, bias, W):
    """Pure-JAX reference reproducing the PyTorch forward (f32)."""
    B, T, D = dials.shape
    h = jnp.zeros((B, D), jnp.float32)
    c = jnp.zeros((B, D), jnp.float32)

    def step(carry, x_t):
        h, c = carry
        gates = x_t @ w_ih_t + h @ w_hh_t + bias[0]
        i = jax.nn.sigmoid(gates[:, :D])
        f = jax.nn.sigmoid(gates[:, D:2 * D])
        g = jnp.tanh(gates[:, 2 * D:3 * D])
        o = jax.nn.sigmoid(gates[:, 3 * D:])
        c = f * c + i * g
        h = o * jnp.tanh(c)
        return (h, c), None

    (h, c), _ = lax.scan(step, (h, c), jnp.swapaxes(dials, 0, 1))
    xWy = (h @ W) @ response.T
    out = jnp.concatenate([h, xWy, response], axis=1)
    return jax.nn.sigmoid(out)


if __name__ == "__main__":
    # Small shapes consistent with the module: args.downsample=True, down_dim=32.
    B, T, D = 4, 8, 32

    key = jax.random.PRNGKey(0)
    k_x, k_r, k_wih, k_whh, k_bih, k_bhh, k_W = jax.random.split(key, 7)

    dials = jax.random.normal(k_x, (B, T, D), jnp.float32)       # (B, T, D) batch-first
    response = jax.random.normal(k_r, (B, D), jnp.float32)       # (B, D)

    # LSTM parameters (PyTorch stores weight_ih/(hh) as (4D, D); we keep them pre-transposed).
    s = 1.0 / jnp.sqrt(jnp.float32(D))
    w_ih_t = jax.random.uniform(k_wih, (D, 4 * D), jnp.float32, -s, s)
    w_hh_t = jax.random.uniform(k_whh, (D, 4 * D), jnp.float32, -s, s)
    b_ih = jax.random.uniform(k_bih, (4 * D,), jnp.float32, -s, s)
    b_hh = jax.random.uniform(k_bhh, (4 * D,), jnp.float32, -s, s)
    bias = (b_ih + b_hh).reshape(1, 4 * D)

    # Bilinear W, xavier-uniform style deterministic init.
    limit = jnp.sqrt(jnp.float32(6.0) / (D + D))
    W = jax.random.uniform(k_W, (D, D), jnp.float32, -limit, limit)

    out = transition_rotation(dials, response, w_ih_t, w_hh_t, bias, W)
    out = jax.block_until_ready(out)

    ref = reference(dials, response, w_ih_t, w_hh_t, bias, W)
    assert out.shape == (B, 2 * D + B), out.shape
    # Kernel runs the matmuls in bf16 on the MXU (f32 accumulation); tolerance loosened accordingly.
    assert jnp.allclose(out, ref, atol=2e-2, rtol=2e-2), float(jnp.max(jnp.abs(out - ref)))

    print("KERNEL_OK")
</pallas_src>

<mosaic_0001>
module attributes {stable_mosaic.version = 11 : i64} {
  func.func @transition_rotation_kernel(%arg0: memref<4x8x32xf32, #tpu.memory_space<vmem>>, %arg1: memref<32x128xf32, #tpu.memory_space<vmem>>, %arg2: memref<32x128xf32, #tpu.memory_space<vmem>>, %arg3: memref<1x128xf32, #tpu.memory_space<vmem>>, %arg4: memref<32x32xf32, #tpu.memory_space<vmem>>, %arg5: memref<4x32xf32, #tpu.memory_space<vmem>>, %arg6: memref<4x32xf32, #tpu.memory_space<vmem>>, %arg7: memref<4x4xf32, #tpu.memory_space<vmem>>) attributes {dimension_semantics = [], scalar_prefetch = 0 : i64, scratch_operands = 0 : i64, tpu.core_type = #tpu.core_type<tc>} {
    %c0 = arith.constant 0 : index
    %c0_0 = arith.constant 0 : index
    %0 = vector.load %arg1[%c0, %c0_0] : memref<32x128xf32, #tpu.memory_space<vmem>>, vector<32x128xf32>
    %1 = arith.truncf %0 : vector<32x128xf32> to vector<32x128xbf16>
    %c0_1 = arith.constant 0 : index
    %c0_2 = arith.constant 0 : index
    %2 = vector.load %arg2[%c0_1, %c0_2] : memref<32x128xf32, #tpu.memory_space<vmem>>, vector<32x128xf32>
    %3 = arith.truncf %2 : vector<32x128xf32> to vector<32x128xbf16>
    %c0_3 = arith.constant 0 : index
    %c0_4 = arith.constant 0 : index
    %4 = vector.load %arg3[%c0_3, %c0_4] : memref<1x128xf32, #tpu.memory_space<vmem>>, vector<1x128xf32>
    %c0_5 = arith.constant 0 : index
    %c0_6 = arith.constant 0 : index
    %c0_7 = arith.constant 0 : index
    %5 = vector.load %arg0[%c0_5, %c0_6, %c0_7] : memref<4x8x32xf32, #tpu.memory_space<vmem>>, vector<4x8x32xf32>
    %6 = vector.shape_cast %5 : vector<4x8x32xf32> to vector<32x32xf32>
    %7 = arith.truncf %6 : vector<32x32xf32> to vector<32x32xbf16>
    %cst = arith.constant dense<0.000000e+00> : vector<32x128xf32>
    %8 = tpu.matmul %7, %1, %cst {dimension_numbers = #tpu.dot_dimension_numbers<[1], [0], [0], [1], [0, 0, 1, 1], [], []>} : vector<32x32xbf16>, vector<32x128xbf16>, vector<32x128xf32> -> vector<32x128xf32>
    %9 = vector.broadcast %4 : vector<1x128xf32> to vector<32x128xf32>
    %10 = arith.addf %8, %9 : vector<32x128xf32>
    %11 = vector.shape_cast %10 : vector<32x128xf32> to vector<4x8x128xf32>
    %c0_8 = arith.constant 0 : index
    %c0_9 = arith.constant 0 : index
    %12 = vector.load %arg4[%c0_8, %c0_9] : memref<32x32xf32, #tpu.memory_space<vmem>>, vector<32x32xf32>
    %13 = arith.truncf %12 : vector<32x32xf32> to vector<32x32xbf16>
    %c0_10 = arith.constant 0 : index
    %c0_11 = arith.constant 0 : index
    %14 = vector.load %arg5[%c0_10, %c0_11] : memref<4x32xf32, #tpu.memory_space<vmem>>, vector<4x32xf32>
    %15 = arith.truncf %14 : vector<4x32xf32> to vector<4x32xbf16>
    %cst_12 = arith.constant dense<0.000000e+00> : vector<32x4xf32>
    %16 = tpu.matmul %13, %15, %cst_12 {dimension_numbers = #tpu.dot_dimension_numbers<[1], [1], [0], [0], [0, 0, 1, 0], [], []>} : vector<32x32xbf16>, vector<4x32xbf16>, vector<32x4xf32> -> vector<32x4xf32>
    %17 = arith.truncf %16 : vector<32x4xf32> to vector<32x4xbf16>
    %cst_13 = arith.constant 0.000000e+00 : f32
    %18 = vector.broadcast %cst_13 : f32 to vector<4x32xf32>
    %cst_14 = arith.constant 0.000000e+00 : f32
    %19 = vector.broadcast %cst_14 : f32 to vector<4x32xf32>
    %20 = vector.extract_strided_slice %11 {offsets = [0, 0, 0], sizes = [4, 1, 128], strides = [1, 1, 1]} : vector<4x8x128xf32> to vector<4x1x128xf32>
    %21 = vector.shape_cast %20 : vector<4x1x128xf32> to vector<4x128xf32>
    %22 = arith.truncf %18 : vector<4x32xf32> to vector<4x32xbf16>
    %cst_15 = arith.constant dense<0.000000e+00> : vector<4x128xf32>
    %23 = tpu.matmul %22, %3, %cst_15 {dimension_numbers = #tpu.dot_dimension_numbers<[1], [0], [0], [1], [0, 0, 1, 1], [], []>} : vector<4x32xbf16>, vector<32x128xbf16>, vector<4x128xf32> -> vector<4x128xf32>
    %24 = arith.addf %21, %23 : vector<4x128xf32>
    %25 = arith.negf %24 : vector<4x128xf32>
    %26 = math.exp %25 : vector<4x128xf32>
    %cst_16 = arith.constant 1.000000e+00 : f32
    %27 = vector.broadcast %cst_16 : f32 to vector<4x128xf32>
    %28 = arith.addf %27, %26 : vector<4x128xf32>
    %29 = arith.divf %27, %28 : vector<4x128xf32>
    %30 = math.tanh %24 : vector<4x128xf32>
    %31 = vector.extract_strided_slice %29 {offsets = [0, 0], sizes = [4, 32], strides = [1, 1]} : vector<4x128xf32> to vector<4x32xf32>
    %32 = vector.extract_strided_slice %29 {offsets = [0, 32], sizes = [4, 32], strides = [1, 1]} : vector<4x128xf32> to vector<4x32xf32>
    %33 = vector.extract_strided_slice %29 {offsets = [0, 96], sizes = [4, 32], strides = [1, 1]} : vector<4x128xf32> to vector<4x32xf32>
    %34 = vector.extract_strided_slice %30 {offsets = [0, 64], sizes = [4, 32], strides = [1, 1]} : vector<4x128xf32> to vector<4x32xf32>
    %35 = arith.mulf %32, %19 : vector<4x32xf32>
    %36 = arith.mulf %31, %34 : vector<4x32xf32>
    %37 = arith.addf %35, %36 : vector<4x32xf32>
    %38 = math.tanh %37 : vector<4x32xf32>
    %39 = arith.mulf %33, %38 : vector<4x32xf32>
    %40 = vector.extract_strided_slice %11 {offsets = [0, 1, 0], sizes = [4, 1, 128], strides = [1, 1, 1]} : vector<4x8x128xf32> to vector<4x1x128xf32>
    %41 = vector.shape_cast %40 : vector<4x1x128xf32> to vector<4x128xf32>
    %42 = arith.truncf %39 : vector<4x32xf32> to vector<4x32xbf16>
    %cst_17 = arith.constant dense<0.000000e+00> : vector<4x128xf32>
    %43 = tpu.matmul %42, %3, %cst_17 {dimension_numbers = #tpu.dot_dimension_numbers<[1], [0], [0], [1], [0, 0, 1, 1], [], []>} : vector<4x32xbf16>, vector<32x128xbf16>, vector<4x128xf32> -> vector<4x128xf32>
    %44 = arith.addf %41, %43 : vector<4x128xf32>
    %45 = arith.negf %44 : vector<4x128xf32>
    %46 = math.exp %45 : vector<4x128xf32>
    %cst_18 = arith.constant 1.000000e+00 : f32
    %47 = vector.broadcast %cst_18 : f32 to vector<4x128xf32>
    %48 = arith.addf %47, %46 : vector<4x128xf32>
    %49 = arith.divf %47, %48 : vector<4x128xf32>
    %50 = math.tanh %44 : vector<4x128xf32>
    %51 = vector.extract_strided_slice %49 {offsets = [0, 0], sizes = [4, 32], strides = [1, 1]} : vector<4x128xf32> to vector<4x32xf32>
    %52 = vector.extract_strided_slice %49 {offsets = [0, 32], sizes = [4, 32], strides = [1, 1]} : vector<4x128xf32> to vector<4x32xf32>
    %53 = vector.extract_strided_slice %49 {offsets = [0, 96], sizes = [4, 32], strides = [1, 1]} : vector<4x128xf32> to vector<4x32xf32>
    %54 = vector.extract_strided_slice %50 {offsets = [0, 64], sizes = [4, 32], strides = [1, 1]} : vector<4x128xf32> to vector<4x32xf32>
    %55 = arith.mulf %52, %37 : vector<4x32xf32>
    %56 = arith.mulf %51, %54 : vector<4x32xf32>
    %57 = arith.addf %55, %56 : vector<4x32xf32>
    %58 = math.tanh %57 : vector<4x32xf32>
    %59 = arith.mulf %53, %58 : vector<4x32xf32>
    %60 = vector.extract_strided_slice %11 {offsets = [0, 2, 0], sizes = [4, 1, 128], strides = [1, 1, 1]} : vector<4x8x128xf32> to vector<4x1x128xf32>
    %61 = vector.shape_cast %60 : vector<4x1x128xf32> to vector<4x128xf32>
    %62 = arith.truncf %59 : vector<4x32xf32> to vector<4x32xbf16>
    %cst_19 = arith.constant dense<0.000000e+00> : vector<4x128xf32>
    %63 = tpu.matmul %62, %3, %cst_19 {dimension_numbers = #tpu.dot_dimension_numbers<[1], [0], [0], [1], [0, 0, 1, 1], [], []>} : vector<4x32xbf16>, vector<32x128xbf16>, vector<4x128xf32> -> vector<4x128xf32>
    %64 = arith.addf %61, %63 : vector<4x128xf32>
    %65 = arith.negf %64 : vector<4x128xf32>
    %66 = math.exp %65 : vector<4x128xf32>
    %cst_20 = arith.constant 1.000000e+00 : f32
    %67 = vector.broadcast %cst_20 : f32 to vector<4x128xf32>
    %68 = arith.addf %67, %66 : vector<4x128xf32>
    %69 = arith.divf %67, %68 : vector<4x128xf32>
    %70 = math.tanh %64 : vector<4x128xf32>
    %71 = vector.extract_strided_slice %69 {offsets = [0, 0], sizes = [4, 32], strides = [1, 1]} : vector<4x128xf32> to vector<4x32xf32>
    %72 = vector.extract_strided_slice %69 {offsets = [0, 32], sizes = [4, 32], strides = [1, 1]} : vector<4x128xf32> to vector<4x32xf32>
    %73 = vector.extract_strided_slice %69 {offsets = [0, 96], sizes = [4, 32], strides = [1, 1]} : vector<4x128xf32> to vector<4x32xf32>
    %74 = vector.extract_strided_slice %70 {offsets = [0, 64], sizes = [4, 32], strides = [1, 1]} : vector<4x128xf32> to vector<4x32xf32>
    %75 = arith.mulf %72, %57 : vector<4x32xf32>
    %76 = arith.mulf %71, %74 : vector<4x32xf32>
    %77 = arith.addf %75, %76 : vector<4x32xf32>
    %78 = math.tanh %77 : vector<4x32xf32>
    %79 = arith.mulf %73, %78 : vector<4x32xf32>
    %80 = vector.extract_strided_slice %11 {offsets = [0, 3, 0], sizes = [4, 1, 128], strides = [1, 1, 1]} : vector<4x8x128xf32> to vector<4x1x128xf32>
    %81 = vector.shape_cast %80 : vector<4x1x128xf32> to vector<4x128xf32>
    %82 = arith.truncf %79 : vector<4x32xf32> to vector<4x32xbf16>
    %cst_21 = arith.constant dense<0.000000e+00> : vector<4x128xf32>
    %83 = tpu.matmul %82, %3, %cst_21 {dimension_numbers = #tpu.dot_dimension_numbers<[1], [0], [0], [1], [0, 0, 1, 1], [], []>} : vector<4x32xbf16>, vector<32x128xbf16>, vector<4x128xf32> -> vector<4x128xf32>
    %84 = arith.addf %81, %83 : vector<4x128xf32>
    %85 = arith.negf %84 : vector<4x128xf32>
    %86 = math.exp %85 : vector<4x128xf32>
    %cst_22 = arith.constant 1.000000e+00 : f32
    %87 = vector.broadcast %cst_22 : f32 to vector<4x128xf32>
    %88 = arith.addf %87, %86 : vector<4x128xf32>
    %89 = arith.divf %87, %88 : vector<4x128xf32>
    %90 = math.tanh %84 : vector<4x128xf32>
    %91 = vector.extract_strided_slice %89 {offsets = [0, 0], sizes = [4, 32], strides = [1, 1]} : vector<4x128xf32> to vector<4x32xf32>
    %92 = vector.extract_strided_slice %89 {offsets = [0, 32], sizes = [4, 32], strides = [1, 1]} : vector<4x128xf32> to vector<4x32xf32>
    %93 = vector.extract_strided_slice %89 {offsets = [0, 96], sizes = [4, 32], strides = [1, 1]} : vector<4x128xf32> to vector<4x32xf32>
    %94 = vector.extract_strided_slice %90 {offsets = [0, 64], sizes = [4, 32], strides = [1, 1]} : vector<4x128xf32> to vector<4x32xf32>
    %95 = arith.mulf %92, %77 : vector<4x32xf32>
    %96 = arith.mulf %91, %94 : vector<4x32xf32>
    %97 = arith.addf %95, %96 : vector<4x32xf32>
    %98 = math.tanh %97 : vector<4x32xf32>
    %99 = arith.mulf %93, %98 : vector<4x32xf32>
    %100 = vector.extract_strided_slice %11 {offsets = [0, 4, 0], sizes = [4, 1, 128], strides = [1, 1, 1]} : vector<4x8x128xf32> to vector<4x1x128xf32>
    %101 = vector.shape_cast %100 : vector<4x1x128xf32> to vector<4x128xf32>
    %102 = arith.truncf %99 : vector<4x32xf32> to vector<4x32xbf16>
    %cst_23 = arith.constant dense<0.000000e+00> : vector<4x128xf32>
    %103 = tpu.matmul %102, %3, %cst_23 {dimension_numbers = #tpu.dot_dimension_numbers<[1], [0], [0], [1], [0, 0, 1, 1], [], []>} : vector<4x32xbf16>, vector<32x128xbf16>, vector<4x128xf32> -> vector<4x128xf32>
    %104 = arith.addf %101, %103 : vector<4x128xf32>
    %105 = arith.negf %104 : vector<4x128xf32>
    %106 = math.exp %105 : vector<4x128xf32>
    %cst_24 = arith.constant 1.000000e+00 : f32
    %107 = vector.broadcast %cst_24 : f32 to vector<4x128xf32>
    %108 = arith.addf %107, %106 : vector<4x128xf32>
    %109 = arith.divf %107, %108 : vector<4x128xf32>
    %110 = math.tanh %104 : vector<4x128xf32>
    %111 = vector.extract_strided_slice %109 {offsets = [0, 0], sizes = [4, 32], strides = [1, 1]} : vector<4x128xf32> to vector<4x32xf32>
    %112 = vector.extract_strided_slice %109 {offsets = [0, 32], sizes = [4, 32], strides = [1, 1]} : vector<4x128xf32> to vector<4x32xf32>
    %113 = vector.extract_strided_slice %109 {offsets = [0, 96], sizes = [4, 32], strides = [1, 1]} : vector<4x128xf32> to vector<4x32xf32>
    %114 = vector.extract_strided_slice %110 {offsets = [0, 64], sizes = [4, 32], strides = [1, 1]} : vector<4x128xf32> to vector<4x32xf32>
    %115 = arith.mulf %112, %97 : vector<4x32xf32>
    %116 = arith.mulf %111, %114 : vector<4x32xf32>
    %117 = arith.addf %115, %116 : vector<4x32xf32>
    %118 = math.tanh %117 : vector<4x32xf32>
    %119 = arith.mulf %113, %118 : vector<4x32xf32>
    %120 = vector.extract_strided_slice %11 {offsets = [0, 5, 0], sizes = [4, 1, 128], strides = [1, 1, 1]} : vector<4x8x128xf32> to vector<4x1x128xf32>
    %121 = vector.shape_cast %120 : vector<4x1x128xf32> to vector<4x128xf32>
    %122 = arith.truncf %119 : vector<4x32xf32> to vector<4x32xbf16>
    %cst_25 = arith.constant dense<0.000000e+00> : vector<4x128xf32>
    %123 = tpu.matmul %122, %3, %cst_25 {dimension_numbers = #tpu.dot_dimension_numbers<[1], [0], [0], [1], [0, 0, 1, 1], [], []>} : vector<4x32xbf16>, vector<32x128xbf16>, vector<4x128xf32> -> vector<4x128xf32>
    %124 = arith.addf %121, %123 : vector<4x128xf32>
    %125 = arith.negf %124 : vector<4x128xf32>
    %126 = math.exp %125 : vector<4x128xf32>
    %cst_26 = arith.constant 1.000000e+00 : f32
    %127 = vector.broadcast %cst_26 : f32 to vector<4x128xf32>
    %128 = arith.addf %127, %126 : vector<4x128xf32>
    %129 = arith.divf %127, %128 : vector<4x128xf32>
    %130 = math.tanh %124 : vector<4x128xf32>
    %131 = vector.extract_strided_slice %129 {offsets = [0, 0], sizes = [4, 32], strides = [1, 1]} : vector<4x128xf32> to vector<4x32xf32>
    %132 = vector.extract_strided_slice %129 {offsets = [0, 32], sizes = [4, 32], strides = [1, 1]} : vector<4x128xf32> to vector<4x32xf32>
    %133 = vector.extract_strided_slice %129 {offsets = [0, 96], sizes = [4, 32], strides = [1, 1]} : vector<4x128xf32> to vector<4x32xf32>
    %134 = vector.extract_strided_slice %130 {offsets = [0, 64], sizes = [4, 32], strides = [1, 1]} : vector<4x128xf32> to vector<4x32xf32>
    %135 = arith.mulf %132, %117 : vector<4x32xf32>
    %136 = arith.mulf %131, %134 : vector<4x32xf32>
    %137 = arith.addf %135, %136 : vector<4x32xf32>
    %138 = math.tanh %137 : vector<4x32xf32>
    %139 = arith.mulf %133, %138 : vector<4x32xf32>
    %140 = vector.extract_strided_slice %11 {offsets = [0, 6, 0], sizes = [4, 1, 128], strides = [1, 1, 1]} : vector<4x8x128xf32> to vector<4x1x128xf32>
    %141 = vector.shape_cast %140 : vector<4x1x128xf32> to vector<4x128xf32>
    %142 = arith.truncf %139 : vector<4x32xf32> to vector<4x32xbf16>
    %cst_27 = arith.constant dense<0.000000e+00> : vector<4x128xf32>
    %143 = tpu.matmul %142, %3, %cst_27 {dimension_numbers = #tpu.dot_dimension_numbers<[1], [0], [0], [1], [0, 0, 1, 1], [], []>} : vector<4x32xbf16>, vector<32x128xbf16>, vector<4x128xf32> -> vector<4x128xf32>
    %144 = arith.addf %141, %143 : vector<4x128xf32>
    %145 = arith.negf %144 : vector<4x128xf32>
    %146 = math.exp %145 : vector<4x128xf32>
    %cst_28 = arith.constant 1.000000e+00 : f32
    %147 = vector.broadcast %cst_28 : f32 to vector<4x128xf32>
    %148 = arith.addf %147, %146 : vector<4x128xf32>
    %149 = arith.divf %147, %148 : vector<4x128xf32>
    %150 = math.tanh %144 : vector<4x128xf32>
    %151 = vector.extract_strided_slice %149 {offsets = [0, 0], sizes = [4, 32], strides = [1, 1]} : vector<4x128xf32> to vector<4x32xf32>
    %152 = vector.extract_strided_slice %149 {offsets = [0, 32], sizes = [4, 32], strides = [1, 1]} : vector<4x128xf32> to vector<4x32xf32>
    %153 = vector.extract_strided_slice %149 {offsets = [0, 96], sizes = [4, 32], strides = [1, 1]} : vector<4x128xf32> to vector<4x32xf32>
    %154 = vector.extract_strided_slice %150 {offsets = [0, 64], sizes = [4, 32], strides = [1, 1]} : vector<4x128xf32> to vector<4x32xf32>
    %155 = arith.mulf %152, %137 : vector<4x32xf32>
    %156 = arith.mulf %151, %154 : vector<4x32xf32>
    %157 = arith.addf %155, %156 : vector<4x32xf32>
    %158 = math.tanh %157 : vector<4x32xf32>
    %159 = arith.mulf %153, %158 : vector<4x32xf32>
    %160 = vector.extract_strided_slice %11 {offsets = [0, 7, 0], sizes = [4, 1, 128], strides = [1, 1, 1]} : vector<4x8x128xf32> to vector<4x1x128xf32>
    %161 = vector.shape_cast %160 : vector<4x1x128xf32> to vector<4x128xf32>
    %162 = arith.truncf %159 : vector<4x32xf32> to vector<4x32xbf16>
    %cst_29 = arith.constant dense<0.000000e+00> : vector<4x128xf32>
    %163 = tpu.matmul %162, %3, %cst_29 {dimension_numbers = #tpu.dot_dimension_numbers<[1], [0], [0], [1], [0, 0, 1, 1], [], []>} : vector<4x32xbf16>, vector<32x128xbf16>, vector<4x128xf32> -> vector<4x128xf32>
    %164 = arith.addf %161, %163 : vector<4x128xf32>
    %165 = arith.negf %164 : vector<4x128xf32>
    %166 = math.exp %165 : vector<4x128xf32>
    %cst_30 = arith.constant 1.000000e+00 : f32
    %167 = vector.broadcast %cst_30 : f32 to vector<4x128xf32>
    %168 = arith.addf %167, %166 : vector<4x128xf32>
    %169 = arith.divf %167, %168 : vector<4x128xf32>
    %170 = math.tanh %164 : vector<4x128xf32>
    %171 = vector.extract_strided_slice %169 {offsets = [0, 0], sizes = [4, 32], strides = [1, 1]} : vector<4x128xf32> to vector<4x32xf32>
    %172 = vector.extract_strided_slice %169 {offsets = [0, 32], sizes = [4, 32], strides = [1, 1]} : vector<4x128xf32> to vector<4x32xf32>
    %173 = vector.extract_strided_slice %169 {offsets = [0, 96], sizes = [4, 32], strides = [1, 1]} : vector<4x128xf32> to vector<4x32xf32>
    %174 = vector.extract_strided_slice %170 {offsets = [0, 64], sizes = [4, 32], strides = [1, 1]} : vector<4x128xf32> to vector<4x32xf32>
    %175 = arith.mulf %172, %157 : vector<4x32xf32>
    %176 = arith.mulf %171, %174 : vector<4x32xf32>
    %177 = arith.addf %175, %176 : vector<4x32xf32>
    %178 = math.tanh %177 : vector<4x32xf32>
    %179 = arith.mulf %173, %178 : vector<4x32xf32>
    %180 = arith.truncf %179 : vector<4x32xf32> to vector<4x32xbf16>
    %cst_31 = arith.constant dense<0.000000e+00> : vector<4x4xf32>
    %181 = tpu.matmul %180, %17, %cst_31 {dimension_numbers = #tpu.dot_dimension_numbers<[1], [0], [0], [1], [0, 0, 1, 1], [], []>} : vector<4x32xbf16>, vector<32x4xbf16>, vector<4x4xf32> -> vector<4x4xf32>
    %182 = arith.negf %179 : vector<4x32xf32>
    %183 = math.exp %182 : vector<4x32xf32>
    %cst_32 = arith.constant 1.000000e+00 : f32
    %184 = vector.broadcast %cst_32 : f32 to vector<4x32xf32>
    %185 = arith.addf %184, %183 : vector<4x32xf32>
    %186 = arith.divf %184, %185 : vector<4x32xf32>
    %c0_33 = arith.constant 0 : index
    %c0_34 = arith.constant 0 : index
    %187 = vector.load %arg6[%c0_33, %c0_34] : memref<4x32xf32, #tpu.memory_space<vmem>>, vector<4x32xf32>
    tpu.vector_store %arg6[%c0_33, %c0_34], %186 {strides = array<i32>} : memref<4x32xf32, #tpu.memory_space<vmem>>, vector<4x32xf32>,
    %188 = arith.negf %181 : vector<4x4xf32>
    %189 = math.exp %188 : vector<4x4xf32>
    %cst_35 = arith.constant 1.000000e+00 : f32
    %190 = vector.broadcast %cst_35 : f32 to vector<4x4xf32>
    %191 = arith.addf %190, %189 : vector<4x4xf32>
    %192 = arith.divf %190, %191 : vector<4x4xf32>
    %c0_36 = arith.constant 0 : index
    %c0_37 = arith.constant 0 : index
    %193 = vector.load %arg7[%c0_36, %c0_37] : memref<4x4xf32, #tpu.memory_space<vmem>>, vector<4x4xf32>
    tpu.vector_store %arg7[%c0_36, %c0_37], %192 {strides = array<i32>} : memref<4x4xf32, #tpu.memory_space<vmem>>, vector<4x4xf32>,
    return
  }
}

</mosaic_0001>

<llo_original>
// kernel: _transition_rotation_impl.1
$region0: #{_transition_rotation_impl.1}
  #allocation0 [shape = 'u32[]', space=smem, size = 0x4, offset = 0x4, fixed_abs, tag = 'smem constant byte address 0x4 - core index']
  #allocation1 [shape = 'u32[72,128]{1,0:T(1,128)}', space=vmem, size = 0x9000, scoped, tag = 'internal scratch']
  %s0 = inlined_call_operand.hbm [shape: f32[4,8,32], index: 0, kind: input, shape index: {}]
  %s1 = inlined_call_operand.hbm [shape: f32[32,128], index: 1, kind: input, shape index: {}]
  %s2 = inlined_call_operand.hbm [shape: f32[32,128], index: 2, kind: input, shape index: {}]
  %s3 = inlined_call_operand.vmem [shape: f32[1,128], index: 3, kind: input, shape index: {}]
  %s4 = inlined_call_operand.hbm [shape: f32[32,32], index: 4, kind: input, shape index: {}]
  %s5 = inlined_call_operand.vmem [shape: f32[4,32], index: 5, kind: input, shape index: {}]
  %s6 = inlined_call_operand.vmem [shape: f32[4,32], index: 6, kind: output, shape index: {0}]
  %s7 = inlined_call_operand.vmem [shape: f32[4,4], index: 7, kind: output, shape index: {1}]
  %8 = xla_tuple %s6, %s7
  %s9 = sld [smem:[#allocation0]]
  $region58: #{_transition_rotation_impl.1} parent=0
    _
  %s11 = ssub.s32 1, %s9
  %s12 = scalar_select 0, %s11, %s9
  $region1: #{_transition_rotation_impl.1} parent=0
    #allocation2 [shape = 'u8[16384]{0}', space=vmem, size = 0x4000, scoped, tag = 'input window, operand 0, single buffered']
    #allocation3 [shape = 's32[1]{0}', space=sflag, size = 0x4, scoped, tag = 'scoped memory for _transition_rotation_impl.1']
    #allocation4 [shape = 'u8[16384]{0}', space=vmem, size = 0x4000, scoped, tag = 'input window, operand 1, single buffered']
    #allocation5 [shape = 's32[1]{0}', space=sflag, size = 0x4, scoped, tag = 'scoped memory for _transition_rotation_impl.1']
    #allocation6 [shape = 'u8[16384]{0}', space=vmem, size = 0x4000, scoped, tag = 'input window, operand 2, single buffered']
    #allocation7 [shape = 'u8[16384]{0}', space=vmem, size = 0x4000, scoped, tag = 'input window, operand 4, single buffered']
    #allocation8 [shape = 's32[1]{0}', space=sflag, size = 0x4, scoped, tag = 'scoped memory for _transition_rotation_impl.1']
    %13 = vsyncpa [#allocation3], 0
    %14 = vsyncpa [#allocation5], 0
    %15 = vsyncpa [#allocation8], 0
    // Predicated region
    $region2: #{_transition_rotation_impl.1} parent=1 // pred_check
      _
    $region3: #{_transition_rotation_impl.1} parent=1 // pred_check_branch
      %17 = sbr.rel (0) target = $region5
    $region4: #{_transition_rotation_impl.1} parent=1 // pred_region
      %19 = vsyncadd [#allocation3], 0
      %s20 = sshll.u32 %s0, 4
      %s21 = int_to_ptr.hbm [resolvable:$true] %s20
      %s22 = sshll.u32 [#allocation2], 4
      %s23 = int_to_ptr.vmem [resolvable:$true] %s22
      %28 = dma.hbm_to_vmem [thread:$0]  %s21, 512, %s23, [#allocation3], 128, 128, 8
    $region5: #{_transition_rotation_impl.1} parent=1 // pred_fallthru
      _
    // Predicated region
    $region6: #{_transition_rotation_impl.1} parent=1 // pred_check
      _
    $region7: #{_transition_rotation_impl.1} parent=1 // pred_check_branch
      %30 = sbr.rel (0) target = $region9
    $region8: #{_transition_rotation_impl.1} parent=1 // pred_region
      %32 = vsyncadd [#allocation5], 0
      %s33 = sshll.u32 %s1, 4
      %s34 = int_to_ptr.hbm [resolvable:$true] %s33
      %s35 = sshll.u32 [#allocation4], 4
      %s36 = int_to_ptr.vmem [resolvable:$true] %s35
      %41 = dma.hbm_to_vmem [thread:$0]  %s34, 512, %s36, [#allocation5], 128, 128, 8
    $region9: #{_transition_rotation_impl.1} parent=1 // pred_fallthru
      _
    // Predicated region
    $region10: #{_transition_rotation_impl.1} parent=1 // pred_check
      _
    $region11: #{_transition_rotation_impl.1} parent=1 // pred_check_branch
      %43 = sbr.rel (0) target = $region13
    $region12: #{_transition_rotation_impl.1} parent=1 // pred_region
      %45 = vsyncadd [#allocation5], 0
      %s46 = sshll.u32 %s2, 4
      %s47 = int_to_ptr.hbm [resolvable:$true] %s46
      %s48 = sshll.u32 [#allocation6], 4
      %s49 = int_to_ptr.vmem [resolvable:$true] %s48
      %54 = dma.hbm_to_vmem [thread:$0]  %s47, 512, %s49, [#allocation5], 128, 128, 8
    $region13: #{_transition_rotation_impl.1} parent=1 // pred_fallthru
      _
    // Predicated region
    $region14: #{_transition_rotation_impl.1} parent=1 // pred_check
      _
    $region15: #{_transition_rotation_impl.1} parent=1 // pred_check_branch
      %56 = sbr.rel (0) target = $region17
    $region16: #{_transition_rotation_impl.1} parent=1 // pred_region
      _
    $region17: #{_transition_rotation_impl.1} parent=1 // pred_fallthru
      _
    // Predicated region
    $region18: #{_transition_rotation_impl.1} parent=1 // pred_check
      _
    $region19: #{_transition_rotation_impl.1} parent=1 // pred_check_branch
      %58 = sbr.rel (0) target = $region21
    $region20: #{_transition_rotation_impl.1} parent=1 // pred_region
      %60 = vsyncadd [#allocation8], 0
      %s61 = sshll.u32 %s4, 4
      %s62 = int_to_ptr.hbm [resolvable:$true] %s61
      %s63 = sshll.u32 [#allocation7], 4
      %s64 = int_to_ptr.vmem [resolvable:$true] %s63
      %69 = dma.hbm_to_vmem [thread:$0]  %s62, 512, %s64, [#allocation8], 128, 128, 8
    $region21: #{_transition_rotation_impl.1} parent=1 // pred_fallthru
      _
    // Predicated region
    $region22: #{_transition_rotation_impl.1} parent=1 // pred_check
      _
    $region23: #{_transition_rotation_impl.1} parent=1 // pred_check_branch
      %71 = sbr.rel (0) target = $region25
    $region24: #{_transition_rotation_impl.1} parent=1 // pred_region
      _
    $region25: #{_transition_rotation_impl.1} parent=1 // pred_fallthru
      _
    // Predicated region
    $region26: #{_transition_rotation_impl.1} parent=1 // pred_check
      _
    $region27: #{_transition_rotation_impl.1} parent=1 // pred_check_branch
      %73 = sbr.rel (0) target = $region29
    $region28: #{_transition_rotation_impl.1} parent=1 // pred_region
      %75 = dma.done [#allocation3], 512
    $region29: #{_transition_rotation_impl.1} parent=1 // pred_fallthru
      _
    // Predicated region
    $region30: #{_transition_rotation_impl.1} parent=1 // pred_check
      _
    $region31: #{_transition_rotation_impl.1} parent=1 // pred_check_branch
      %77 = sbr.rel (0) target = $region33
    $region32: #{_transition_rotation_impl.1} parent=1 // pred_region
      %79 = dma.done [#allocation5], 512
    $region33: #{_transition_rotation_impl.1} parent=1 // pred_fallthru
      _
    // Predicated region
    $region34: #{_transition_rotation_impl.1} parent=1 // pred_check
      _
    $region35: #{_transition_rotation_impl.1} parent=1 // pred_check_branch
      %81 = sbr.rel (0) target = $region37
    $region36: #{_transition_rotation_impl.1} parent=1 // pred_region
      %83 = dma.done [#allocation5], 512
    $region37: #{_transition_rotation_impl.1} parent=1 // pred_fallthru
      _
    // Predicated region
    $region38: #{_transition_rotation_impl.1} parent=1 // pred_check
      _
    $region39: #{_transition_rotation_impl.1} parent=1 // pred_check_branch
      %85 = sbr.rel (0) target = $region41
    $region40: #{_transition_rotation_impl.1} parent=1 // pred_region
      %87 = dma.done [#allocation8], 512
    $region41: #{_transition_rotation_impl.1} parent=1 // pred_fallthru
      _
    %v89 = vld [vmem:[#allocation4] sm:$0xff]
    %v90 = vld [vmem:[#allocation4 + $0x8] sm:$0xff]
    %v91 = vld [vmem:[#allocation4 + $0x10] sm:$0xff]
    %v92 = vld [vmem:[#allocation4 + $0x18] sm:$0xff]
    %v93 = vpack.c.bf16 %v90, %v89
    %v94 = vpack.c.bf16 %v92, %v91
    %v95 = vld [vmem:[#allocation6] sm:$0xff]
    %v96 = vld [vmem:[#allocation6 + $0x8] sm:$0xff]
    %v97 = vld [vmem:[#allocation6 + $0x10] sm:$0xff]
    %v98 = vld [vmem:[#allocation6 + $0x18] sm:$0xff]
    %v99 = vpack.c.bf16 %v96, %v95
    %v100 = vpack.c.bf16 %v98, %v97
    %v101 = vld [vmem:[%s3] sm:$0x1]
    %v102 = vld [vmem:[#allocation2] sm:$0xff]
    %v103 = vld [vmem:[#allocation2 + $0x8] sm:$0xff]
    %v104 = vld [vmem:[#allocation2 + $0x10] sm:$0xff]
    %v105 = vld [vmem:[#allocation2 + $0x18] sm:$0xff]
    %v106 = vpack.c.bf16 %v103, %v102
    %v107 = vpack.c.bf16 %v105, %v104
    %v109 = vperm.slane %v101, 0
    %vm111 = vcmask 261120
    %v113 = vsel %vm111, %v106, 0
    %v116 = vsel %vm111, %v107, 0
    %118 = vmatpush.bf16.msra.mxu0 0
    %119 = vmatpush.bf16.msra.mxu0 0
    %120 = vmatpush.bf16.msra.mxu0 0
    %121 = vmatpush.bf16.msra.mxu0 0
    %122 = vmatpush.bf16.msra.mxu0 0
    %123 = vmatpush.bf16.msra.mxu0 0
    %124 = vmatpush.bf16.msra.mxu0 %v94
    %125 = vmatpush.bf16.msra.mxu0 %v93
    %126 = vmatmul.bf16.gmra.mxu0 %v113
    %v127 = vpop.f32.mrf.mxu0
    %v128 = vadd.f32 %v109, %v127
    %v129 = vpop.f32.mrf.mxu0
    %v130 = vadd.f32 %v109, %v129
    %131 = vmatmul.bf16.gmra.mxu0 %v116
    %v132 = vpop.f32.mrf.mxu0
    %v133 = vadd.f32 %v109, %v132
    %v134 = vpop.f32.mrf.mxu0
    %v135 = vadd.f32 %v109, %v134
    %136 = vdwg.mxu0
    %v137 = vld [vmem:[#allocation7] sm:$0xff]
    %v138 = vld [vmem:[#allocation7 + $0x8] sm:$0xff]
    %v139 = vld [vmem:[#allocation7 + $0x10] sm:$0xff]
    %v140 = vld [vmem:[#allocation7 + $0x18] sm:$0xff]
    %v141 = vpack.c.bf16 %v138, %v137
    %v142 = vpack.c.bf16 %v140, %v139
    %v143 = vld [vmem:[%s5] sm:$0xf]
    %v144 = vpack.c.bf16 %v143, %v143
    %v146 = vsel %vm111, %v141, 0
    %v149 = vsel %vm111, %v142, 0
    %v152 = vsel %vm111, %v144, 0
    %154 = vmatpush.bf16.xpose.msra.mxu0 0
    %155 = vmatpush.bf16.xpose.msra.mxu0 0
    %156 = vmatpush.bf16.xpose.msra.mxu0 0
    %157 = vmatpush.bf16.xpose.msra.mxu0 0
    %158 = vmatpush.bf16.xpose.msra.mxu0 0
    %159 = vmatpush.bf16.xpose.msra.mxu0 0
    %160 = vmatpush.bf16.xpose.msra.mxu0 0
    %161 = vmatpush.bf16.xpose.msra.mxu0 %v152
    %162 = vmatmul.bf16.gmra.mxu0 %v146
    %v163 = vpop.f32.mrf.mxu0
    %v164 = vadd.f32 0.0, %v163
    %v165 = vpop.f32.mrf.mxu0
    %v166 = vadd.f32 0.0, %v165
    %167 = vmatmul.bf16.gmra.mxu0 %v149
    %v168 = vpop.f32.mrf.mxu0
    %v169 = vadd.f32 0.0, %v168
    %v170 = vpop.f32.mrf.mxu0
    %v171 = vadd.f32 0.0, %v170
    %172 = vdwg.mxu0
    %v173 = vpack.c.bf16 %v166, %v164
    %v174 = vpack.c.bf16 %v171, %v169
    %v176 = vsel %vm111, 0, 0
    %178 = vmatpush.bf16.msra.mxu0 0
    %179 = vmatpush.bf16.msra.mxu0 0
    %180 = vmatpush.bf16.msra.mxu0 0
    %181 = vmatpush.bf16.msra.mxu0 0
    %182 = vmatpush.bf16.msra.mxu0 0
    %183 = vmatpush.bf16.msra.mxu0 0
    %184 = vmatpush.bf16.msra.mxu0 %v100
    %185 = vmatpush.bf16.msra.mxu0 %v99
    %186 = vmatmul.bf16.gmra.mxu0 %v176
    %v187 = vpop.f32.mrf.mxu0
    %v188 = vadd.f32 0.0, %v187
    %v189 = vpop.f32.mrf.mxu0
    %190 = vdwg.mxu0
    %v192 = vrot.slane %v188, 1
    %v193 = vrot.slane %v188, 2
    %v194 = vrot.slane %v188, 3
    %v199 = vadd.f32 %v128, %v188
    %v200 = vadd.f32 %v130, %v192
    %v201 = vadd.f32 %v133, %v193
    %v202 = vadd.f32 %v135, %v194
    %v203 = vxor.u32 %v199, 2147483648
    %v204 = vxor.u32 %v200, 2147483648
    %v205 = vxor.u32 %v201, 2147483648
    %v206 = vxor.u32 %v202, 2147483648
    %v207 = vmul.f32 %v203, 1.442695
    %v208 = vpow.pop %v207
    %v209 = vmul.f32 %v204, 1.442695
    %v210 = vpow.pop %v209
    %v211 = vmul.f32 %v205, 1.442695
    %v212 = vpow.pop %v211
    %v213 = vmul.f32 %v206, 1.442695
    %v214 = vpow.pop %v213
    %v215 = vadd.f32 %v208, 1.0
    %v216 = vadd.f32 %v210, 1.0
    %v217 = vadd.f32 %v212, 1.0
    %v218 = vadd.f32 %v214, 1.0
    %v219 = vrcp.pop %v215
    %v220 = vmul.f32 %v215, %v219
    %v221 = vsub.f32 1.0, %v220
    %v222 = vmul.f32 %v219, %v221
    %v223 = vadd.f32 %v219, %v222
    %vm224 = vweird.f32 %v215
    %vm225 = vweird.f32 %v219
    %vm226 = vmor %vm224, %vm225
    %v227 = vsel %vm226, %v219, %v223
    %v228 = vand.u32 2147483647, %v215
    %vm229 = vcmp.eq.f32.partialorder %v228, 8.507059e+37
    %v230 = vand.u32 %v215, 2147483648
    %v231 = vor.u32 1.1754944e-38, %v230
    %v232 = vsel %vm229, %v231, %v227
    %v233 = vmul.f32 1.0, %v232
    %v234 = vrcp.pop %v216
    %v235 = vmul.f32 %v216, %v234
    %v236 = vsub.f32 1.0, %v235
    %v237 = vmul.f32 %v234, %v236
    %v238 = vadd.f32 %v234, %v237
    %vm239 = vweird.f32 %v216
    %vm240 = vweird.f32 %v234
    %vm241 = vmor %vm239, %vm240
    %v242 = vsel %vm241, %v234, %v238
    %v243 = vand.u32 2147483647, %v216
    %vm244 = vcmp.eq.f32.partialorder %v243, 8.507059e+37
    %v245 = vand.u32 %v216, 2147483648
    %v246 = vor.u32 1.1754944e-38, %v245
    %v247 = vsel %vm244, %v246, %v242
    %v248 = vmul.f32 1.0, %v247
    %v249 = vrcp.pop %v217
    %v250 = vmul.f32 %v217, %v249
    %v251 = vsub.f32 1.0, %v250
    %v252 = vmul.f32 %v249, %v251
    %v253 = vadd.f32 %v249, %v252
    %vm254 = vweird.f32 %v217
    %vm255 = vweird.f32 %v249
    %vm256 = vmor %vm254, %vm255
    %v257 = vsel %vm256, %v249, %v253
    %v258 = vand.u32 2147483647, %v217
    %vm259 = vcmp.eq.f32.partialorder %v258, 8.507059e+37
    %v260 = vand.u32 %v217, 2147483648
    %v261 = vor.u32 1.1754944e-38, %v260
    %v262 = vsel %vm259, %v261, %v257
    %v263 = vmul.f32 1.0, %v262
    %v264 = vrcp.pop %v218
    %v265 = vmul.f32 %v218, %v264
    %v266 = vsub.f32 1.0, %v265
    %v267 = vmul.f32 %v264, %v266
    %v268 = vadd.f32 %v264, %v267
    %vm269 = vweird.f32 %v218
    %vm270 = vweird.f32 %v264
    %vm271 = vmor %vm269, %vm270
    %v272 = vsel %vm271, %v264, %v268
    %v273 = vand.u32 2147483647, %v218
    %vm274 = vcmp.eq.f32.partialorder %v273, 8.507059e+37
    %v275 = vand.u32 %v218, 2147483648
    %v276 = vor.u32 1.1754944e-38, %v275
    %v277 = vsel %vm274, %v276, %v272
    %v278 = vmul.f32 1.0, %v277
    %v279 = vtanh.pop %v199
    %v280 = vtanh.pop %v200
    %v281 = vtanh.pop %v201
    %v282 = vtanh.pop %v202
    %v283 = vmul.f32 %v233, 0.0
    %v284 = vmul.f32 %v248, 0.0
    %v285 = vmul.f32 %v263, 0.0
    %v286 = vmul.f32 %v278, 0.0
    %291 = vrot.lane.b32.xlu0 %v279, 64
    %v292 = vpop.permute.xlu0 %291
    %293 = vrot.lane.b32.xlu0 %v280, 64
    %v294 = vpop.permute.xlu0 %293
    %295 = vrot.lane.b32.xlu0 %v281, 64
    %v296 = vpop.permute.xlu0 %295
    %297 = vrot.lane.b32.xlu0 %v282, 64
    %v298 = vpop.permute.xlu0 %297
    %v303 = vmul.f32 %v233, %v292
    %v304 = vmul.f32 %v248, %v294
    %v305 = vmul.f32 %v263, %v296
    %v306 = vmul.f32 %v278, %v298
    %311 = vrot.lane.b32.xlu0 %v303, 32
    %v312 = vpop.permute.xlu0 %311
    %313 = vrot.lane.b32.xlu0 %v304, 32
    %v314 = vpop.permute.xlu0 %313
    %315 = vrot.lane.b32.xlu0 %v305, 32
    %v316 = vpop.permute.xlu0 %315
    %317 = vrot.lane.b32.xlu0 %v306, 32
    %v318 = vpop.permute.xlu0 %317
    %v323 = vadd.f32 %v283, %v312
    %v324 = vadd.f32 %v284, %v314
    %v325 = vadd.f32 %v285, %v316
    %v326 = vadd.f32 %v286, %v318
    %v327 = vtanh.pop %v323
    %v328 = vtanh.pop %v324
    %v329 = vtanh.pop %v325
    %v330 = vtanh.pop %v326
    %335 = vrot.lane.b32.xlu0 %v327, 64
    %v336 = vpop.permute.xlu0 %335
    %337 = vrot.lane.b32.xlu0 %v328, 64
    %v338 = vpop.permute.xlu0 %337
    %339 = vrot.lane.b32.xlu0 %v329, 64
    %v340 = vpop.permute.xlu0 %339
    %341 = vrot.lane.b32.xlu0 %v330, 64
    %v342 = vpop.permute.xlu0 %341
    %v347 = vmul.f32 %v233, %v336
    %v348 = vmul.f32 %v248, %v338
    %v349 = vmul.f32 %v263, %v340
    %v350 = vmul.f32 %v278, %v342
    %v351 = vpack.c.bf16 %v347, %v347
    %v352 = vpack.c.bf16 %v348, %v348
    %v353 = vpack.c.bf16 %v349, %v349
    %v354 = vpack.c.bf16 %v350, %v350
    %v359 = vunpack.c.l.b16 %v351
    %v360 = vunpack.c.l.b16 %v352
    %v361 = vunpack.c.l.b16 %v353
    %v362 = vunpack.c.l.b16 %v354
    %v363 = vrot.slane %v360, 7
    %vm364 = vcmask 1041409
    %v365 = vsel %vm364, %v363, %v359
    %v366 = vrot.slane %v361, 6
    %vm367 = vcmask 1042434
    %v368 = vsel %vm367, %v366, %v365
    %v369 = vrot.slane %v362, 5
    %vm370 = vcmask 1043459
    %v371 = vsel %vm370, %v369, %v368
    %v372 = vpack.c.b16 %v371, %v371
    %373 = vrot.lane.b32.xlu0 %v372, 32
    %v374 = vpop.permute.xlu0 %373
    %v376 = vsel %vm111, %v374, 0
    %378 = vmatpush.bf16.msra.mxu0 0
    %379 = vmatpush.bf16.msra.mxu0 0
    %380 = vmatpush.bf16.msra.mxu0 0
    %381 = vmatpush.bf16.msra.mxu0 0
    %382 = vmatpush.bf16.msra.mxu0 0
    %383 = vmatpush.bf16.msra.mxu0 0
    %384 = vmatpush.bf16.msra.mxu0 %v100
    %385 = vmatpush.bf16.msra.mxu0 %v99
    %386 = vmatmul.bf16.gmra.mxu0 %v376
    %v387 = vpop.f32.mrf.mxu0
    %v388 = vadd.f32 0.0, %v387
    %v389 = vpop.f32.mrf.mxu0
    %390 = vdwg.mxu0
    %v392 = vrot.slane %v388, 7
    %v393 = vrot.slane %v388, 1
    %v394 = vrot.slane %v388, 2
    %v399 = vadd.f32 %v128, %v392
    %v400 = vadd.f32 %v130, %v388
    %v401 = vadd.f32 %v133, %v393
    %v402 = vadd.f32 %v135, %v394
    %v403 = vxor.u32 %v399, 2147483648
    %v404 = vxor.u32 %v400, 2147483648
    %v405 = vxor.u32 %v401, 2147483648
    %v406 = vxor.u32 %v402, 2147483648
    %v407 = vmul.f32 %v403, 1.442695
    %v408 = vpow.pop %v407
    %v409 = vmul.f32 %v404, 1.442695
    %v410 = vpow.pop %v409
    %v411 = vmul.f32 %v405, 1.442695
    %v412 = vpow.pop %v411
    %v413 = vmul.f32 %v406, 1.442695
    %v414 = vpow.pop %v413
    %v415 = vadd.f32 %v408, 1.0
    %v416 = vadd.f32 %v410, 1.0
    %v417 = vadd.f32 %v412, 1.0
    %v418 = vadd.f32 %v414, 1.0
    %v419 = vrcp.pop %v415
    %v420 = vmul.f32 %v415, %v419
    %v421 = vsub.f32 1.0, %v420
    %v422 = vmul.f32 %v419, %v421
    %v423 = vadd.f32 %v419, %v422
    %vm424 = vweird.f32 %v415
    %vm425 = vweird.f32 %v419
    %vm426 = vmor %vm424, %vm425
    %v427 = vsel %vm426, %v419, %v423
    %v428 = vand.u32 2147483647, %v415
    %vm429 = vcmp.eq.f32.partialorder %v428, 8.507059e+37
    %v430 = vand.u32 %v415, 2147483648
    %v431 = vor.u32 1.1754944e-38, %v430
    %v432 = vsel %vm429, %v431, %v427
    %v433 = vmul.f32 1.0, %v432
    %v434 = vrcp.pop %v416
    %v435 = vmul.f32 %v416, %v434
    %v436 = vsub.f32 1.0, %v435
    %v437 = vmul.f32 %v434, %v436
    %v438 = vadd.f32 %v434, %v437
    %vm439 = vweird.f32 %v416
    %vm440 = vweird.f32 %v434
    %vm441 = vmor %vm439, %vm440
    %v442 = vsel %vm441, %v434, %v438
    %v443 = vand.u32 2147483647, %v416
    %vm444 = vcmp.eq.f32.partialorder %v443, 8.507059e+37
    %v445 = vand.u32 %v416, 2147483648
    %v446 = vor.u32 1.1754944e-38, %v445
    %v447 = vsel %vm444, %v446, %v442
    %v448 = vmul.f32 1.0, %v447
    %v449 = vrcp.pop %v417
    %v450 = vmul.f32 %v417, %v449
    %v451 = vsub.f32 1.0, %v450
    %v452 = vmul.f32 %v449, %v451
    %v453 = vadd.f32 %v449, %v452
    %vm454 = vweird.f32 %v417
    %vm455 = vweird.f32 %v449
    %vm456 = vmor %vm454, %vm455
    %v457 = vsel %vm456, %v449, %v453
    %v458 = vand.u32 2147483647, %v417
    %vm459 = vcmp.eq.f32.partialorder %v458, 8.507059e+37
    %v460 = vand.u32 %v417, 2147483648
    %v461 = vor.u32 1.1754944e-38, %v460
    %v462 = vsel %vm459, %v461, %v457
    %v463 = vmul.f32 1.0, %v462
    %v464 = vrcp.pop %v418
    %v465 = vmul.f32 %v418, %v464
    %v466 = vsub.f32 1.0, %v465
    %v467 = vmul.f32 %v464, %v466
    %v468 = vadd.f32 %v464, %v467
    %vm469 = vweird.f32 %v418
    %vm470 = vweird.f32 %v464
    %vm471 = vmor %vm469, %vm470
    %v472 = vsel %vm471, %v464, %v468
    %v473 = vand.u32 2147483647, %v418
    %vm474 = vcmp.eq.f32.partialorder %v473, 8.507059e+37
    %v475 = vand.u32 %v418, 2147483648
    %v476 = vor.u32 1.1754944e-38, %v475
    %v477 = vsel %vm474, %v476, %v472
    %v478 = vmul.f32 1.0, %v477
    %v479 = vtanh.pop %v399
    %v480 = vtanh.pop %v400
    %v481 = vtanh.pop %v401
    %v482 = vtanh.pop %v402
    %v487 = vrot.slane %v323, 7
    %v488 = vrot.slane %v324, 7
    %v489 = vrot.slane %v325, 7
    %v490 = vrot.slane %v326, 7
    %v495 = vmul.f32 %v433, %v487
    %v496 = vmul.f32 %v448, %v488
    %v497 = vmul.f32 %v463, %v489
    %v498 = vmul.f32 %v478, %v490
    %503 = vrot.lane.b32.xlu0 %v479, 64
    %v504 = vpop.permute.xlu0 %503
    %505 = vrot.lane.b32.xlu0 %v480, 64
    %v506 = vpop.permute.xlu0 %505
    %507 = vrot.lane.b32.xlu0 %v481, 64
    %v508 = vpop.permute.xlu0 %507
    %509 = vrot.lane.b32.xlu0 %v482, 64
    %v510 = vpop.permute.xlu0 %509
    %v515 = vmul.f32 %v433, %v504
    %v516 = vmul.f32 %v448, %v506
    %v517 = vmul.f32 %v463, %v508
    %v518 = vmul.f32 %v478, %v510
    %523 = vrot.lane.b32.xlu0 %v515, 32
    %v524 = vpop.permute.xlu0 %523
    %525 = vrot.lane.b32.xlu0 %v516, 32
    %v526 = vpop.permute.xlu0 %525
    %527 = vrot.lane.b32.xlu0 %v517, 32
    %v528 = vpop.permute.xlu0 %527
    %529 = vrot.lane.b32.xlu0 %v518, 32
    %v530 = vpop.permute.xlu0 %529
    %v535 = vadd.f32 %v495, %v524
    %v536 = vadd.f32 %v496, %v526
    %v537 = vadd.f32 %v497, %v528
    %v538 = vadd.f32 %v498, %v530
    %v539 = vtanh.pop %v535
    %v540 = vtanh.pop %v536
    %v541 = vtanh.pop %v537
    %v542 = vtanh.pop %v538
    %547 = vrot.lane.b32.xlu0 %v539, 64
    %v548 = vpop.permute.xlu0 %547
    %549 = vrot.lane.b32.xlu0 %v540, 64
    %v550 = vpop.permute.xlu0 %549
    %551 = vrot.lane.b32.xlu0 %v541, 64
    %v552 = vpop.permute.xlu0 %551
    %553 = vrot.lane.b32.xlu0 %v542, 64
    %v554 = vpop.permute.xlu0 %553
    %v559 = vmul.f32 %v433, %v548
    %v560 = vmul.f32 %v448, %v550
    %v561 = vmul.f32 %v463, %v552
    %v562 = vmul.f32 %v478, %v554
    %v563 = vpack.c.bf16 %v559, %v559
    %v564 = vpack.c.bf16 %v560, %v560
    %v565 = vpack.c.bf16 %v561, %v561
    %v566 = vpack.c.bf16 %v562, %v562
    %v571 = vunpack.c.l.b16 %v563
    %v572 = vunpack.c.l.b16 %v564
    %v573 = vunpack.c.l.b16 %v565
    %v574 = vunpack.c.l.b16 %v566
    %v575 = vrot.slane %v571, 1
    %v576 = vsel %vm364, %v572, %v575
    %v577 = vrot.slane %v573, 7
    %v578 = vsel %vm367, %v577, %v576
    %v579 = vrot.slane %v574, 6
    %v580 = vsel %vm370, %v579, %v578
    %v581 = vpack.c.b16 %v580, %v580
    %582 = vrot.lane.b32.xlu0 %v581, 32
    %v583 = vpop.permute.xlu0 %582
    %v585 = vsel %vm111, %v583, 0
    %587 = vmatpush.bf16.msra.mxu0 0
    %588 = vmatpush.bf16.msra.mxu0 0
    %589 = vmatpush.bf16.msra.mxu0 0
    %590 = vmatpush.bf16.msra.mxu0 0
    %591 = vmatpush.bf16.msra.mxu0 0
    %592 = vmatpush.bf16.msra.mxu0 0
    %593 = vmatpush.bf16.msra.mxu0 %v100
    %594 = vmatpush.bf16.msra.mxu0 %v99
    %595 = vmatmul.bf16.gmra.mxu0 %v585
    %v596 = vpop.f32.mrf.mxu0
    %v597 = vadd.f32 0.0, %v596
    %v598 = vpop.f32.mrf.mxu0
    %599 = vdwg.mxu0
    %v601 = vrot.slane %v597, 6
    %v602 = vrot.slane %v597, 7
    %v603 = vrot.slane %v597, 1
    %v608 = vadd.f32 %v128, %v601
    %v609 = vadd.f32 %v130, %v602
    %v610 = vadd.f32 %v133, %v597
    %v611 = vadd.f32 %v135, %v603
    %v612 = vxor.u32 %v608, 2147483648
    %v613 = vxor.u32 %v609, 2147483648
    %v614 = vxor.u32 %v610, 2147483648
    %v615 = vxor.u32 %v611, 2147483648
    %v616 = vmul.f32 %v612, 1.442695
    %v617 = vpow.pop %v616
    %v618 = vmul.f32 %v613, 1.442695
    %v619 = vpow.pop %v618
    %v620 = vmul.f32 %v614, 1.442695
    %v621 = vpow.pop %v620
    %v622 = vmul.f32 %v615, 1.442695
    %v623 = vpow.pop %v622
    %v624 = vadd.f32 %v617, 1.0
    %v625 = vadd.f32 %v619, 1.0
    %v626 = vadd.f32 %v621, 1.0
    %v627 = vadd.f32 %v623, 1.0
    %v628 = vrcp.pop %v624
    %v629 = vmul.f32 %v624, %v628
    %v630 = vsub.f32 1.0, %v629
    %v631 = vmul.f32 %v628, %v630
    %v632 = vadd.f32 %v628, %v631
    %vm633 = vweird.f32 %v624
    %vm634 = vweird.f32 %v628
    %vm635 = vmor %vm633, %vm634
    %v636 = vsel %vm635, %v628, %v632
    %v637 = vand.u32 2147483647, %v624
    %vm638 = vcmp.eq.f32.partialorder %v637, 8.507059e+37
    %v639 = vand.u32 %v624, 2147483648
    %v640 = vor.u32 1.1754944e-38, %v639
    %v641 = vsel %vm638, %v640, %v636
    %v642 = vmul.f32 1.0, %v641
    %v643 = vrcp.pop %v625
    %v644 = vmul.f32 %v625, %v643
    %v645 = vsub.f32 1.0, %v644
    %v646 = vmul.f32 %v643, %v645
    %v647 = vadd.f32 %v643, %v646
    %vm648 = vweird.f32 %v625
    %vm649 = vweird.f32 %v643
    %vm650 = vmor %vm648, %vm649
    %v651 = vsel %vm650, %v643, %v647
    %v652 = vand.u32 2147483647, %v625
    %vm653 = vcmp.eq.f32.partialorder %v652, 8.507059e+37
    %v654 = vand.u32 %v625, 2147483648
    %v655 = vor.u32 1.1754944e-38, %v654
    %v656 = vsel %vm653, %v655, %v651
    %v657 = vmul.f32 1.0, %v656
    %v658 = vrcp.pop %v626
    %v659 = vmul.f32 %v626, %v658
    %v660 = vsub.f32 1.0, %v659
    %v661 = vmul.f32 %v658, %v660
    %v662 = vadd.f32 %v658, %v661
    %vm663 = vweird.f32 %v626
    %vm664 = vweird.f32 %v658
    %vm665 = vmor %vm663, %vm664
    %v666 = vsel %vm665, %v658, %v662
    %v667 = vand.u32 2147483647, %v626
    %vm668 = vcmp.eq.f32.partialorder %v667, 8.507059e+37
    %v669 = vand.u32 %v626, 2147483648
    %v670 = vor.u32 1.1754944e-38, %v669
    %v671 = vsel %vm668, %v670, %v666
    %v672 = vmul.f32 1.0, %v671
    %v673 = vrcp.pop %v627
    %v674 = vmul.f32 %v627, %v673
    %v675 = vsub.f32 1.0, %v674
    %v676 = vmul.f32 %v673, %v675
    %v677 = vadd.f32 %v673, %v676
    %vm678 = vweird.f32 %v627
    %vm679 = vweird.f32 %v673
    %vm680 = vmor %vm678, %vm679
    %v681 = vsel %vm680, %v673, %v677
    %v682 = vand.u32 2147483647, %v627
    %vm683 = vcmp.eq.f32.partialorder %v682, 8.507059e+37
    %v684 = vand.u32 %v627, 2147483648
    %v685 = vor.u32 1.1754944e-38, %v684
    %v686 = vsel %vm683, %v685, %v681
    %v687 = vmul.f32 1.0, %v686
    %v688 = vtanh.pop %v608
    %v689 = vtanh.pop %v609
    %v690 = vtanh.pop %v610
    %v691 = vtanh.pop %v611
    %v696 = vrot.slane %v535, 7
    %v697 = vrot.slane %v536, 7
    %v698 = vrot.slane %v537, 7
    %v699 = vrot.slane %v538, 7
    %v704 = vmul.f32 %v642, %v696
    %v705 = vmul.f32 %v657, %v697
    %v706 = vmul.f32 %v672, %v698
    %v707 = vmul.f32 %v687, %v699
    %712 = vrot.lane.b32.xlu0 %v688, 64
    %v713 = vpop.permute.xlu0 %712
    %714 = vrot.lane.b32.xlu0 %v689, 64
    %v715 = vpop.permute.xlu0 %714
    %716 = vrot.lane.b32.xlu0 %v690, 64
    %v717 = vpop.permute.xlu0 %716
    %718 = vrot.lane.b32.xlu0 %v691, 64
    %v719 = vpop.permute.xlu0 %718
    %v724 = vmul.f32 %v642, %v713
    %v725 = vmul.f32 %v657, %v715
    %v726 = vmul.f32 %v672, %v717
    %v727 = vmul.f32 %v687, %v719
    %732 = vrot.lane.b32.xlu0 %v724, 32
    %v733 = vpop.permute.xlu0 %732
    %734 = vrot.lane.b32.xlu0 %v725, 32
    %v735 = vpop.permute.xlu0 %734
    %736 = vrot.lane.b32.xlu0 %v726, 32
    %v737 = vpop.permute.xlu0 %736
    %738 = vrot.lane.b32.xlu0 %v727, 32
    %v739 = vpop.permute.xlu0 %738
    %v744 = vadd.f32 %v704, %v733
    %v745 = vadd.f32 %v705, %v735
    %v746 = vadd.f32 %v706, %v737
    %v747 = vadd.f32 %v707, %v739
    %v748 = vtanh.pop %v744
    %v749 = vtanh.pop %v745
    %v750 = vtanh.pop %v746
    %v751 = vtanh.pop %v747
    %756 = vrot.lane.b32.xlu0 %v748, 64
    %v757 = vpop.permute.xlu0 %756
    %758 = vrot.lane.b32.xlu0 %v749, 64
    %v759 = vpop.permute.xlu0 %758
    %760 = vrot.lane.b32.xlu0 %v750, 64
    %v761 = vpop.permute.xlu0 %760
    %762 = vrot.lane.b32.xlu0 %v751, 64
    %v763 = vpop.permute.xlu0 %762
    %v768 = vmul.f32 %v642, %v757
    %v769 = vmul.f32 %v657, %v759
    %v770 = vmul.f32 %v672, %v761
    %v771 = vmul.f32 %v687, %v763
    %v772 = vpack.c.bf16 %v768, %v768
    %v773 = vpack.c.bf16 %v769, %v769
    %v774 = vpack.c.bf16 %v770, %v770
    %v775 = vpack.c.bf16 %v771, %v771
    %v780 = vunpack.c.l.b16 %v772
    %v781 = vunpack.c.l.b16 %v773
    %v782 = vunpack.c.l.b16 %v774
    %v783 = vunpack.c.l.b16 %v775
    %v784 = vrot.slane %v780, 2
    %v785 = vrot.slane %v781, 1
    %v786 = vsel %vm364, %v785, %v784
    %v787 = vsel %vm367, %v782, %v786
    %v788 = vrot.slane %v783, 7
    %v789 = vsel %vm370, %v788, %v787
    %v790 = vpack.c.b16 %v789, %v789
    %791 = vrot.lane.b32.xlu0 %v790, 32
    %v792 = vpop.permute.xlu0 %791
    %v794 = vsel %vm111, %v792, 0
    %796 = vmatpush.bf16.msra.mxu0 0
    %797 = vmatpush.bf16.msra.mxu0 0
    %798 = vmatpush.bf16.msra.mxu0 0
    %799 = vmatpush.bf16.msra.mxu0 0
    %800 = vmatpush.bf16.msra.mxu0 0
    %801 = vmatpush.bf16.msra.mxu0 0
    %802 = vmatpush.bf16.msra.mxu0 %v100
    %803 = vmatpush.bf16.msra.mxu0 %v99
    %804 = vmatmul.bf16.gmra.mxu0 %v794
    %v805 = vpop.f32.mrf.mxu0
    %v806 = vadd.f32 0.0, %v805
    %v807 = vpop.f32.mrf.mxu0
    %808 = vdwg.mxu0
    %v810 = vrot.slane %v806, 5
    %v811 = vrot.slane %v806, 6
    %v812 = vrot.slane %v806, 7
    %v817 = vadd.f32 %v128, %v810
    %v818 = vadd.f32 %v130, %v811
    %v819 = vadd.f32 %v133, %v812
    %v820 = vadd.f32 %v135, %v806
    %v821 = vxor.u32 %v817, 2147483648
    %v822 = vxor.u32 %v818, 2147483648
    %v823 = vxor.u32 %v819, 2147483648
    %v824 = vxor.u32 %v820, 2147483648
    %v825 = vmul.f32 %v821, 1.442695
    %v826 = vpow.pop %v825
    %v827 = vmul.f32 %v822, 1.442695
    %v828 = vpow.pop %v827
    %v829 = vmul.f32 %v823, 1.442695
    %v830 = vpow.pop %v829
    %v831 = vmul.f32 %v824, 1.442695
    %v832 = vpow.pop %v831
    %v833 = vadd.f32 %v826, 1.0
    %v834 = vadd.f32 %v828, 1.0
    %v835 = vadd.f32 %v830, 1.0
    %v836 = vadd.f32 %v832, 1.0
    %v837 = vrcp.pop %v833
    %v838 = vmul.f32 %v833, %v837
    %v839 = vsub.f32 1.0, %v838
    %v840 = vmul.f32 %v837, %v839
    %v841 = vadd.f32 %v837, %v840
    %vm842 = vweird.f32 %v833
    %vm843 = vweird.f32 %v837
    %vm844 = vmor %vm842, %vm843
    %v845 = vsel %vm844, %v837, %v841
    %v846 = vand.u32 2147483647, %v833
    %vm847 = vcmp.eq.f32.partialorder %v846, 8.507059e+37
    %v848 = vand.u32 %v833, 2147483648
    %v849 = vor.u32 1.1754944e-38, %v848
    %v850 = vsel %vm847, %v849, %v845
    %v851 = vmul.f32 1.0, %v850
    %v852 = vrcp.pop %v834
    %v853 = vmul.f32 %v834, %v852
    %v854 = vsub.f32 1.0, %v853
    %v855 = vmul.f32 %v852, %v854
    %v856 = vadd.f32 %v852, %v855
    %vm857 = vweird.f32 %v834
    %vm858 = vweird.f32 %v852
    %vm859 = vmor %vm857, %vm858
    %v860 = vsel %vm859, %v852, %v856
    %v861 = vand.u32 2147483647, %v834
    %vm862 = vcmp.eq.f32.partialorder %v861, 8.507059e+37
    %v863 = vand.u32 %v834, 2147483648
    %v864 = vor.u32 1.1754944e-38, %v863
    %v865 = vsel %vm862, %v864, %v860
    %v866 = vmul.f32 1.0, %v865
    %v867 = vrcp.pop %v835
    %v868 = vmul.f32 %v835, %v867
    %v869 = vsub.f32 1.0, %v868
    %v870 = vmul.f32 %v867, %v869
    %v871 = vadd.f32 %v867, %v870
    %vm872 = vweird.f32 %v835
    %vm873 = vweird.f32 %v867
    %vm874 = vmor %vm872, %vm873
    %v875 = vsel %vm874, %v867, %v871
    %v876 = vand.u32 2147483647, %v835
    %vm877 = vcmp.eq.f32.partialorder %v876, 8.507059e+37
    %v878 = vand.u32 %v835, 2147483648
    %v879 = vor.u32 1.1754944e-38, %v878
    %v880 = vsel %vm877, %v879, %v875
    %v881 = vmul.f32 1.0, %v880
    %v882 = vrcp.pop %v836
    %v883 = vmul.f32 %v836, %v882
    %v884 = vsub.f32 1.0, %v883
    %v885 = vmul.f32 %v882, %v884
    %v886 = vadd.f32 %v882, %v885
    %vm887 = vweird.f32 %v836
    %vm888 = vweird.f32 %v882
    %vm889 = vmor %vm887, %vm888
    %v890 = vsel %vm889, %v882, %v886
    %v891 = vand.u32 2147483647, %v836
    %vm892 = vcmp.eq.f32.partialorder %v891, 8.507059e+37
    %v893 = vand.u32 %v836, 2147483648
    %v894 = vor.u32 1.1754944e-38, %v893
    %v895 = vsel %vm892, %v894, %v890
    %v896 = vmul.f32 1.0, %v895
    %v897 = vtanh.pop %v817
    %v898 = vtanh.pop %v818
    %v899 = vtanh.pop %v819
    %v900 = vtanh.pop %v820
    %v905 = vrot.slane %v744, 7
    %v906 = vrot.slane %v745, 7
    %v907 = vrot.slane %v746, 7
    %v908 = vrot.slane %v747, 7
    %v913 = vmul.f32 %v851, %v905
    %v914 = vmul.f32 %v866, %v906
    %v915 = vmul.f32 %v881, %v907
    %v916 = vmul.f32 %v896, %v908
    %921 = vrot.lane.b32.xlu0 %v897, 64
    %v922 = vpop.permute.xlu0 %921
    %923 = vrot.lane.b32.xlu0 %v898, 64
    %v924 = vpop.permute.xlu0 %923
    %925 = vrot.lane.b32.xlu0 %v899, 64
    %v926 = vpop.permute.xlu0 %925
    %927 = vrot.lane.b32.xlu0 %v900, 64
    %v928 = vpop.permute.xlu0 %927
    %v933 = vmul.f32 %v851, %v922
    %v934 = vmul.f32 %v866, %v924
    %v935 = vmul.f32 %v881, %v926
    %v936 = vmul.f32 %v896, %v928
    %941 = vrot.lane.b32.xlu0 %v933, 32
    %v942 = vpop.permute.xlu0 %941
    %943 = vrot.lane.b32.xlu0 %v934, 32
    %v944 = vpop.permute.xlu0 %943
    %945 = vrot.lane.b32.xlu0 %v935, 32
    %v946 = vpop.permute.xlu0 %945
    %947 = vrot.lane.b32.xlu0 %v936, 32
    %v948 = vpop.permute.xlu0 %947
    %v953 = vadd.f32 %v913, %v942
    %v954 = vadd.f32 %v914, %v944
    %v955 = vadd.f32 %v915, %v946
    %v956 = vadd.f32 %v916, %v948
    %v957 = vtanh.pop %v953
    %v958 = vtanh.pop %v954
    %v959 = vtanh.pop %v955
    %v960 = vtanh.pop %v956
    %965 = vrot.lane.b32.xlu0 %v957, 64
    %v966 = vpop.permute.xlu0 %965
    %967 = vrot.lane.b32.xlu0 %v958, 64
    %v968 = vpop.permute.xlu0 %967
    %969 = vrot.lane.b32.xlu0 %v959, 64
    %v970 = vpop.permute.xlu0 %969
    %971 = vrot.lane.b32.xlu0 %v960, 64
    %v972 = vpop.permute.xlu0 %971
    %v977 = vmul.f32 %v851, %v966
    %v978 = vmul.f32 %v866, %v968
    %v979 = vmul.f32 %v881, %v970
    %v980 = vmul.f32 %v896, %v972
    %v981 = vpack.c.bf16 %v977, %v977
    %v982 = vpack.c.bf16 %v978, %v978
    %v983 = vpack.c.bf16 %v979, %v979
    %v984 = vpack.c.bf16 %v980, %v980
    %v989 = vunpack.c.l.b16 %v981
    %v990 = vunpack.c.l.b16 %v982
    %v991 = vunpack.c.l.b16 %v983
    %v992 = vunpack.c.l.b16 %v984
    %v993 = vrot.slane %v989, 3
    %v994 = vrot.slane %v990, 2
    %v995 = vsel %vm364, %v994, %v993
    %v996 = vrot.slane %v991, 1
    %v997 = vsel %vm367, %v996, %v995
    %v998 = vsel %vm370, %v992, %v997
    %v999 = vpack.c.b16 %v998, %v998
    %1000 = vrot.lane.b32.xlu0 %v999, 32
    %v1001 = vpop.permute.xlu0 %1000
    %v1003 = vsel %vm111, %v1001, 0
    %1005 = vmatpush.bf16.msra.mxu0 0
    %1006 = vmatpush.bf16.msra.mxu0 0
    %1007 = vmatpush.bf16.msra.mxu0 0
    %1008 = vmatpush.bf16.msra.mxu0 0
    %1009 = vmatpush.bf16.msra.mxu0 0
    %1010 = vmatpush.bf16.msra.mxu0 0
    %1011 = vmatpush.bf16.msra.mxu0 %v100
    %1012 = vmatpush.bf16.msra.mxu0 %v99
    %1013 = vmatmul.bf16.gmra.mxu0 %v1003
    %v1014 = vpop.f32.mrf.mxu0
    %v1015 = vadd.f32 0.0, %v1014
    %v1016 = vpop.f32.mrf.mxu0
    %1017 = vdwg.mxu0
    %v1019 = vrot.slane %v1015, 4
    %v1020 = vrot.slane %v1015, 5
    %v1021 = vrot.slane %v1015, 6
    %v1022 = vrot.slane %v1015, 7
    %v1027 = vadd.f32 %v128, %v1019
    %v1028 = vadd.f32 %v130, %v1020
    %v1029 = vadd.f32 %v133, %v1021
    %v1030 = vadd.f32 %v135, %v1022
    %v1031 = vxor.u32 %v1027, 2147483648
    %v1032 = vxor.u32 %v1028, 2147483648
    %v1033 = vxor.u32 %v1029, 2147483648
    %v1034 = vxor.u32 %v1030, 2147483648
    %v1035 = vmul.f32 %v1031, 1.442695
    %v1036 = vpow.pop %v1035
    %v1037 = vmul.f32 %v1032, 1.442695
    %v1038 = vpow.pop %v1037
    %v1039 = vmul.f32 %v1033, 1.442695
    %v1040 = vpow.pop %v1039
    %v1041 = vmul.f32 %v1034, 1.442695
    %v1042 = vpow.pop %v1041
    %v1043 = vadd.f32 %v1036, 1.0
    %v1044 = vadd.f32 %v1038, 1.0
    %v1045 = vadd.f32 %v1040, 1.0
    %v1046 = vadd.f32 %v1042, 1.0
    %v1047 = vrcp.pop %v1043
    %v1048 = vmul.f32 %v1043, %v1047
    %v1049 = vsub.f32 1.0, %v1048
    %v1050 = vmul.f32 %v1047, %v1049
    %v1051 = vadd.f32 %v1047, %v1050
    %vm1052 = vweird.f32 %v1043
    %vm1053 = vweird.f32 %v1047
    %vm1054 = vmor %vm1052, %vm1053
    %v1055 = vsel %vm1054, %v1047, %v1051
    %v1056 = vand.u32 2147483647, %v1043
    %vm1057 = vcmp.eq.f32.partialorder %v1056, 8.507059e+37
    %v1058 = vand.u32 %v1043, 2147483648
    %v1059 = vor.u32 1.1754944e-38, %v1058
    %v1060 = vsel %vm1057, %v1059, %v1055
    %v1061 = vmul.f32 1.0, %v1060
    %v1062 = vrcp.pop %v1044
    %v1063 = vmul.f32 %v1044, %v1062
    %v1064 = vsub.f32 1.0, %v1063
    %v1065 = vmul.f32 %v1062, %v1064
    %v1066 = vadd.f32 %v1062, %v1065
    %vm1067 = vweird.f32 %v1044
    %vm1068 = vweird.f32 %v1062
    %vm1069 = vmor %vm1067, %vm1068
    %v1070 = vsel %vm1069, %v1062, %v1066
    %v1071 = vand.u32 2147483647, %v1044
    %vm1072 = vcmp.eq.f32.partialorder %v1071, 8.507059e+37
    %v1073 = vand.u32 %v1044, 2147483648
    %v1074 = vor.u32 1.1754944e-38, %v1073
    %v1075 = vsel %vm1072, %v1074, %v1070
    %v1076 = vmul.f32 1.0, %v1075
    %v1077 = vrcp.pop %v1045
    %v1078 = vmul.f32 %v1045, %v1077
    %v1079 = vsub.f32 1.0, %v1078
    %v1080 = vmul.f32 %v1077, %v1079
    %v1081 = vadd.f32 %v1077, %v1080
    %vm1082 = vweird.f32 %v1045
    %vm1083 = vweird.f32 %v1077
    %vm1084 = vmor %vm1082, %vm1083
    %v1085 = vsel %vm1084, %v1077, %v1081
    %v1086 = vand.u32 2147483647, %v1045
    %vm1087 = vcmp.eq.f32.partialorder %v1086, 8.507059e+37
    %v1088 = vand.u32 %v1045, 2147483648
    %v1089 = vor.u32 1.1754944e-38, %v1088
    %v1090 = vsel %vm1087, %v1089, %v1085
    %v1091 = vmul.f32 1.0, %v1090
    %v1092 = vrcp.pop %v1046
    %v1093 = vmul.f32 %v1046, %v1092
    %v1094 = vsub.f32 1.0, %v1093
    %v1095 = vmul.f32 %v1092, %v1094
    %v1096 = vadd.f32 %v1092, %v1095
    %vm1097 = vweird.f32 %v1046
    %vm1098 = vweird.f32 %v1092
    %vm1099 = vmor %vm1097, %vm1098
    %v1100 = vsel %vm1099, %v1092, %v1096
    %v1101 = vand.u32 2147483647, %v1046
    %vm1102 = vcmp.eq.f32.partialorder %v1101, 8.507059e+37
    %v1103 = vand.u32 %v1046, 2147483648
    %v1104 = vor.u32 1.1754944e-38, %v1103
    %v1105 = vsel %vm1102, %v1104, %v1100
    %v1106 = vmul.f32 1.0, %v1105
    %v1107 = vtanh.pop %v1027
    %v1108 = vtanh.pop %v1028
    %v1109 = vtanh.pop %v1029
    %v1110 = vtanh.pop %v1030
    %v1115 = vrot.slane %v953, 7
    %v1116 = vrot.slane %v954, 7
    %v1117 = vrot.slane %v955, 7
    %v1118 = vrot.slane %v956, 7
    %v1123 = vmul.f32 %v1061, %v1115
    %v1124 = vmul.f32 %v1076, %v1116
    %v1125 = vmul.f32 %v1091, %v1117
    %v1126 = vmul.f32 %v1106, %v1118
    %1131 = vrot.lane.b32.xlu0 %v1107, 64
    %v1132 = vpop.permute.xlu0 %1131
    %1133 = vrot.lane.b32.xlu0 %v1108, 64
    %v1134 = vpop.permute.xlu0 %1133
    %1135 = vrot.lane.b32.xlu0 %v1109, 64
    %v1136 = vpop.permute.xlu0 %1135
    %1137 = vrot.lane.b32.xlu0 %v1110, 64
    %v1138 = vpop.permute.xlu0 %1137
    %v1143 = vmul.f32 %v1061, %v1132
    %v1144 = vmul.f32 %v1076, %v1134
    %v1145 = vmul.f32 %v1091, %v1136
    %v1146 = vmul.f32 %v1106, %v1138
    %1151 = vrot.lane.b32.xlu0 %v1143, 32
    %v1152 = vpop.permute.xlu0 %1151
    %1153 = vrot.lane.b32.xlu0 %v1144, 32
    %v1154 = vpop.permute.xlu0 %1153
    %1155 = vrot.lane.b32.xlu0 %v1145, 32
    %v1156 = vpop.permute.xlu0 %1155
    %1157 = vrot.lane.b32.xlu0 %v1146, 32
    %v1158 = vpop.permute.xlu0 %1157
    %v1163 = vadd.f32 %v1123, %v1152
    %v1164 = vadd.f32 %v1124, %v1154
    %v1165 = vadd.f32 %v1125, %v1156
    %v1166 = vadd.f32 %v1126, %v1158
    %v1167 = vtanh.pop %v1163
    %v1168 = vtanh.pop %v1164
    %v1169 = vtanh.pop %v1165
    %v1170 = vtanh.pop %v1166
    %1175 = vrot.lane.b32.xlu0 %v1167, 64
    %v1176 = vpop.permute.xlu0 %1175
    %1177 = vrot.lane.b32.xlu0 %v1168, 64
    %v1178 = vpop.permute.xlu0 %1177
    %1179 = vrot.lane.b32.xlu0 %v1169, 64
    %v1180 = vpop.permute.xlu0 %1179
    %1181 = vrot.lane.b32.xlu0 %v1170, 64
    %v1182 = vpop.permute.xlu0 %1181
    %v1187 = vmul.f32 %v1061, %v1176
    %v1188 = vmul.f32 %v1076, %v1178
    %v1189 = vmul.f32 %v1091, %v1180
    %v1190 = vmul.f32 %v1106, %v1182
    %v1191 = vpack.c.bf16 %v1187, %v1187
    %v1192 = vpack.c.bf16 %v1188, %v1188
    %v1193 = vpack.c.bf16 %v1189, %v1189
    %v1194 = vpack.c.bf16 %v1190, %v1190
    %v1199 = vunpack.c.l.b16 %v1191
    %v1200 = vunpack.c.l.b16 %v1192
    %v1201 = vunpack.c.l.b16 %v1193
    %v1202 = vunpack.c.l.b16 %v1194
    %v1203 = vrot.slane %v1199, 4
    %v1204 = vrot.slane %v1200, 3
    %v1205 = vsel %vm364, %v1204, %v1203
    %v1206 = vrot.slane %v1201, 2
    %v1207 = vsel %vm367, %v1206, %v1205
    %v1208 = vrot.slane %v1202, 1
    %v1209 = vsel %vm370, %v1208, %v1207
    %v1210 = vpack.c.b16 %v1209, %v1209
    %1211 = vrot.lane.b32.xlu0 %v1210, 32
    %v1212 = vpop.permute.xlu0 %1211
    %v1214 = vsel %vm111, %v1212, 0
    %1216 = vmatpush.bf16.msra.mxu0 0
    %1217 = vmatpush.bf16.msra.mxu0 0
    %1218 = vmatpush.bf16.msra.mxu0 0
    %1219 = vmatpush.bf16.msra.mxu0 0
    %1220 = vmatpush.bf16.msra.mxu0 0
    %1221 = vmatpush.bf16.msra.mxu0 0
    %1222 = vmatpush.bf16.msra.mxu0 %v100
    %1223 = vmatpush.bf16.msra.mxu0 %v99
    %1224 = vmatmul.bf16.gmra.mxu0 %v1214
    %v1225 = vpop.f32.mrf.mxu0
    %v1226 = vadd.f32 0.0, %v1225
    %v1227 = vpop.f32.mrf.mxu0
    %1228 = vdwg.mxu0
    %v1230 = vrot.slane %v1226, 3
    %v1231 = vrot.slane %v1226, 4
    %v1232 = vrot.slane %v1226, 5
    %v1233 = vrot.slane %v1226, 6
    %v1238 = vadd.f32 %v128, %v1230
    %v1239 = vadd.f32 %v130, %v1231
    %v1240 = vadd.f32 %v133, %v1232
    %v1241 = vadd.f32 %v135, %v1233
    %v1242 = vxor.u32 %v1238, 2147483648
    %v1243 = vxor.u32 %v1239, 2147483648
    %v1244 = vxor.u32 %v1240, 2147483648
    %v1245 = vxor.u32 %v1241, 2147483648
    %v1246 = vmul.f32 %v1242, 1.442695
    %v1247 = vpow.pop %v1246
    %v1248 = vmul.f32 %v1243, 1.442695
    %v1249 = vpow.pop %v1248
    %v1250 = vmul.f32 %v1244, 1.442695
    %v1251 = vpow.pop %v1250
    %v1252 = vmul.f32 %v1245, 1.442695
    %v1253 = vpow.pop %v1252
    %v1254 = vadd.f32 %v1247, 1.0
    %v1255 = vadd.f32 %v1249, 1.0
    %v1256 = vadd.f32 %v1251, 1.0
    %v1257 = vadd.f32 %v1253, 1.0
    %v1258 = vrcp.pop %v1254
    %v1259 = vmul.f32 %v1254, %v1258
    %v1260 = vsub.f32 1.0, %v1259
    %v1261 = vmul.f32 %v1258, %v1260
    %v1262 = vadd.f32 %v1258, %v1261
    %vm1263 = vweird.f32 %v1254
    %vm1264 = vweird.f32 %v1258
    %vm1265 = vmor %vm1263, %vm1264
    %v1266 = vsel %vm1265, %v1258, %v1262
    %v1267 = vand.u32 2147483647, %v1254
    %vm1268 = vcmp.eq.f32.partialorder %v1267, 8.507059e+37
    %v1269 = vand.u32 %v1254, 2147483648
    %v1270 = vor.u32 1.1754944e-38, %v1269
    %v1271 = vsel %vm1268, %v1270, %v1266
    %v1272 = vmul.f32 1.0, %v1271
    %v1273 = vrcp.pop %v1255
    %v1274 = vmul.f32 %v1255, %v1273
    %v1275 = vsub.f32 1.0, %v1274
    %v1276 = vmul.f32 %v1273, %v1275
    %v1277 = vadd.f32 %v1273, %v1276
    %vm1278 = vweird.f32 %v1255
    %vm1279 = vweird.f32 %v1273
    %vm1280 = vmor %vm1278, %vm1279
    %v1281 = vsel %vm1280, %v1273, %v1277
    %v1282 = vand.u32 2147483647, %v1255
    %vm1283 = vcmp.eq.f32.partialorder %v1282, 8.507059e+37
    %v1284 = vand.u32 %v1255, 2147483648
    %v1285 = vor.u32 1.1754944e-38, %v1284
    %v1286 = vsel %vm1283, %v1285, %v1281
    %v1287 = vmul.f32 1.0, %v1286
    %v1288 = vrcp.pop %v1256
    %v1289 = vmul.f32 %v1256, %v1288
    %v1290 = vsub.f32 1.0, %v1289
    %v1291 = vmul.f32 %v1288, %v1290
    %v1292 = vadd.f32 %v1288, %v1291
    %vm1293 = vweird.f32 %v1256
    %vm1294 = vweird.f32 %v1288
    %vm1295 = vmor %vm1293, %vm1294
    %v1296 = vsel %vm1295, %v1288, %v1292
    %v1297 = vand.u32 2147483647, %v1256
    %vm1298 = vcmp.eq.f32.partialorder %v1297, 8.507059e+37
    %v1299 = vand.u32 %v1256, 2147483648
    %v1300 = vor.u32 1.1754944e-38, %v1299
    %v1301 = vsel %vm1298, %v1300, %v1296
    %v1302 = vmul.f32 1.0, %v1301
    %v1303 = vrcp.pop %v1257
    %v1304 = vmul.f32 %v1257, %v1303
    %v1305 = vsub.f32 1.0, %v1304
    %v1306 = vmul.f32 %v1303, %v1305
    %v1307 = vadd.f32 %v1303, %v1306
    %vm1308 = vweird.f32 %v1257
    %vm1309 = vweird.f32 %v1303
    %vm1310 = vmor %vm1308, %vm1309
    %v1311 = vsel %vm1310, %v1303, %v1307
    %v1312 = vand.u32 2147483647, %v1257
    %vm1313 = vcmp.eq.f32.partialorder %v1312, 8.507059e+37
    %v1314 = vand.u32 %v1257, 2147483648
    %v1315 = vor.u32 1.1754944e-38, %v1314
    %v1316 = vsel %vm1313, %v1315, %v1311
    %v1317 = vmul.f32 1.0, %v1316
    %v1318 = vtanh.pop %v1238
    %v1319 = vtanh.pop %v1239
    %v1320 = vtanh.pop %v1240
    %v1321 = vtanh.pop %v1241
    %v1326 = vrot.slane %v1163, 7
    %v1327 = vrot.slane %v1164, 7
    %v1328 = vrot.slane %v1165, 7
    %v1329 = vrot.slane %v1166, 7
    %v1334 = vmul.f32 %v1272, %v1326
    %v1335 = vmul.f32 %v1287, %v1327
    %v1336 = vmul.f32 %v1302, %v1328
    %v1337 = vmul.f32 %v1317, %v1329
    %1342 = vrot.lane.b32.xlu0 %v1318, 64
    %v1343 = vpop.permute.xlu0 %1342
    %1344 = vrot.lane.b32.xlu0 %v1319, 64
    %v1345 = vpop.permute.xlu0 %1344
    %1346 = vrot.lane.b32.xlu0 %v1320, 64
    %v1347 = vpop.permute.xlu0 %1346
    %1348 = vrot.lane.b32.xlu0 %v1321, 64
    %v1349 = vpop.permute.xlu0 %1348
    %v1354 = vmul.f32 %v1272, %v1343
    %v1355 = vmul.f32 %v1287, %v1345
    %v1356 = vmul.f32 %v1302, %v1347
    %v1357 = vmul.f32 %v1317, %v1349
    %1362 = vrot.lane.b32.xlu0 %v1354, 32
    %v1363 = vpop.permute.xlu0 %1362
    %1364 = vrot.lane.b32.xlu0 %v1355, 32
    %v1365 = vpop.permute.xlu0 %1364
    %1366 = vrot.lane.b32.xlu0 %v1356, 32
    %v1367 = vpop.permute.xlu0 %1366
    %1368 = vrot.lane.b32.xlu0 %v1357, 32
    %v1369 = vpop.permute.xlu0 %1368
    %v1374 = vadd.f32 %v1334, %v1363
    %v1375 = vadd.f32 %v1335, %v1365
    %v1376 = vadd.f32 %v1336, %v1367
    %v1377 = vadd.f32 %v1337, %v1369
    %v1378 = vtanh.pop %v1374
    %v1379 = vtanh.pop %v1375
    %v1380 = vtanh.pop %v1376
    %v1381 = vtanh.pop %v1377
    %1386 = vrot.lane.b32.xlu0 %v1378, 64
    %v1387 = vpop.permute.xlu0 %1386
    %1388 = vrot.lane.b32.xlu0 %v1379, 64
    %v1389 = vpop.permute.xlu0 %1388
    %1390 = vrot.lane.b32.xlu0 %v1380, 64
    %v1391 = vpop.permute.xlu0 %1390
    %1392 = vrot.lane.b32.xlu0 %v1381, 64
    %v1393 = vpop.permute.xlu0 %1392
    %v1398 = vmul.f32 %v1272, %v1387
    %v1399 = vmul.f32 %v1287, %v1389
    %v1400 = vmul.f32 %v1302, %v1391
    %v1401 = vmul.f32 %v1317, %v1393
    %v1402 = vpack.c.bf16 %v1398, %v1398
    %v1403 = vpack.c.bf16 %v1399, %v1399
    %v1404 = vpack.c.bf16 %v1400, %v1400
    %v1405 = vpack.c.bf16 %v1401, %v1401
    %v1410 = vunpack.c.l.b16 %v1402
    %v1411 = vunpack.c.l.b16 %v1403
    %v1412 = vunpack.c.l.b16 %v1404
    %v1413 = vunpack.c.l.b16 %v1405
    %v1414 = vrot.slane %v1410, 5
    %v1415 = vrot.slane %v1411, 4
    %v1416 = vsel %vm364, %v1415, %v1414
    %v1417 = vrot.slane %v1412, 3
    %v1418 = vsel %vm367, %v1417, %v1416
    %v1419 = vrot.slane %v1413, 2
    %v1420 = vsel %vm370, %v1419, %v1418
    %v1421 = vpack.c.b16 %v1420, %v1420
    %1422 = vrot.lane.b32.xlu0 %v1421, 32
    %v1423 = vpop.permute.xlu0 %1422
    %v1425 = vsel %vm111, %v1423, 0
    %1427 = vmatpush.bf16.msra.mxu0 0
    %1428 = vmatpush.bf16.msra.mxu0 0
    %1429 = vmatpush.bf16.msra.mxu0 0
    %1430 = vmatpush.bf16.msra.mxu0 0
    %1431 = vmatpush.bf16.msra.mxu0 0
    %1432 = vmatpush.bf16.msra.mxu0 0
    %1433 = vmatpush.bf16.msra.mxu0 %v100
    %1434 = vmatpush.bf16.msra.mxu0 %v99
    %1435 = vmatmul.bf16.gmra.mxu0 %v1425
    %v1436 = vpop.f32.mrf.mxu0
    %v1437 = vadd.f32 0.0, %v1436
    %v1438 = vpop.f32.mrf.mxu0
    %1439 = vdwg.mxu0
    %v1441 = vrot.slane %v1437, 2
    %v1442 = vrot.slane %v1437, 3
    %v1443 = vrot.slane %v1437, 4
    %v1444 = vrot.slane %v1437, 5
    %v1449 = vadd.f32 %v128, %v1441
    %v1450 = vadd.f32 %v130, %v1442
    %v1451 = vadd.f32 %v133, %v1443
    %v1452 = vadd.f32 %v135, %v1444
    %v1453 = vxor.u32 %v1449, 2147483648
    %v1454 = vxor.u32 %v1450, 2147483648
    %v1455 = vxor.u32 %v1451, 2147483648
    %v1456 = vxor.u32 %v1452, 2147483648
    %v1457 = vmul.f32 %v1453, 1.442695
    %v1458 = vpow.pop %v1457
    %v1459 = vmul.f32 %v1454, 1.442695
    %v1460 = vpow.pop %v1459
    %v1461 = vmul.f32 %v1455, 1.442695
    %v1462 = vpow.pop %v1461
    %v1463 = vmul.f32 %v1456, 1.442695
    %v1464 = vpow.pop %v1463
    %v1465 = vadd.f32 %v1458, 1.0
    %v1466 = vadd.f32 %v1460, 1.0
    %v1467 = vadd.f32 %v1462, 1.0
    %v1468 = vadd.f32 %v1464, 1.0
    %v1469 = vrcp.pop %v1465
    %v1470 = vmul.f32 %v1465, %v1469
    %v1471 = vsub.f32 1.0, %v1470
    %v1472 = vmul.f32 %v1469, %v1471
    %v1473 = vadd.f32 %v1469, %v1472
    %vm1474 = vweird.f32 %v1465
    %vm1475 = vweird.f32 %v1469
    %vm1476 = vmor %vm1474, %vm1475
    %v1477 = vsel %vm1476, %v1469, %v1473
    %v1478 = vand.u32 2147483647, %v1465
    %vm1479 = vcmp.eq.f32.partialorder %v1478, 8.507059e+37
    %v1480 = vand.u32 %v1465, 2147483648
    %v1481 = vor.u32 1.1754944e-38, %v1480
    %v1482 = vsel %vm1479, %v1481, %v1477
    %v1483 = vmul.f32 1.0, %v1482
    %v1484 = vrcp.pop %v1466
    %v1485 = vmul.f32 %v1466, %v1484
    %v1486 = vsub.f32 1.0, %v1485
    %v1487 = vmul.f32 %v1484, %v1486
    %v1488 = vadd.f32 %v1484, %v1487
    %vm1489 = vweird.f32 %v1466
    %vm1490 = vweird.f32 %v1484
    %vm1491 = vmor %vm1489, %vm1490
    %v1492 = vsel %vm1491, %v1484, %v1488
    %v1493 = vand.u32 2147483647, %v1466
    %vm1494 = vcmp.eq.f32.partialorder %v1493, 8.507059e+37
    %v1495 = vand.u32 %v1466, 2147483648
    %v1496 = vor.u32 1.1754944e-38, %v1495
    %v1497 = vsel %vm1494, %v1496, %v1492
    %v1498 = vmul.f32 1.0, %v1497
    %v1499 = vrcp.pop %v1467
    %v1500 = vmul.f32 %v1467, %v1499
    %v1501 = vsub.f32 1.0, %v1500
    %v1502 = vmul.f32 %v1499, %v1501
    %v1503 = vadd.f32 %v1499, %v1502
    %vm1504 = vweird.f32 %v1467
    %vm1505 = vweird.f32 %v1499
    %vm1506 = vmor %vm1504, %vm1505
    %v1507 = vsel %vm1506, %v1499, %v1503
    %v1508 = vand.u32 2147483647, %v1467
    %vm1509 = vcmp.eq.f32.partialorder %v1508, 8.507059e+37
    %v1510 = vand.u32 %v1467, 2147483648
    %v1511 = vor.u32 1.1754944e-38, %v1510
    %v1512 = vsel %vm1509, %v1511, %v1507
    %v1513 = vmul.f32 1.0, %v1512
    %v1514 = vrcp.pop %v1468
    %v1515 = vmul.f32 %v1468, %v1514
    %v1516 = vsub.f32 1.0, %v1515
    %v1517 = vmul.f32 %v1514, %v1516
    %v1518 = vadd.f32 %v1514, %v1517
    %vm1519 = vweird.f32 %v1468
    %vm1520 = vweird.f32 %v1514
    %vm1521 = vmor %vm1519, %vm1520
    %v1522 = vsel %vm1521, %v1514, %v1518
    %v1523 = vand.u32 2147483647, %v1468
    %vm1524 = vcmp.eq.f32.partialorder %v1523, 8.507059e+37
    %v1525 = vand.u32 %v1468, 2147483648
    %v1526 = vor.u32 1.1754944e-38, %v1525
    %v1527 = vsel %vm1524, %v1526, %v1522
    %v1528 = vmul.f32 1.0, %v1527
    %v1529 = vtanh.pop %v1449
    %v1530 = vtanh.pop %v1450
    %v1531 = vtanh.pop %v1451
    %v1532 = vtanh.pop %v1452
    %v1537 = vrot.slane %v1374, 7
    %v1538 = vrot.slane %v1375, 7
    %v1539 = vrot.slane %v1376, 7
    %v1540 = vrot.slane %v1377, 7
    %v1545 = vmul.f32 %v1483, %v1537
    %v1546 = vmul.f32 %v1498, %v1538
    %v1547 = vmul.f32 %v1513, %v1539
    %v1548 = vmul.f32 %v1528, %v1540
    %1553 = vrot.lane.b32.xlu0 %v1529, 64
    %v1554 = vpop.permute.xlu0 %1553
    %1555 = vrot.lane.b32.xlu0 %v1530, 64
    %v1556 = vpop.permute.xlu0 %1555
    %1557 = vrot.lane.b32.xlu0 %v1531, 64
    %v1558 = vpop.permute.xlu0 %1557
    %1559 = vrot.lane.b32.xlu0 %v1532, 64
    %v1560 = vpop.permute.xlu0 %1559
    %v1565 = vmul.f32 %v1483, %v1554
    %v1566 = vmul.f32 %v1498, %v1556
    %v1567 = vmul.f32 %v1513, %v1558
    %v1568 = vmul.f32 %v1528, %v1560
    %1573 = vrot.lane.b32.xlu0 %v1565, 32
    %v1574 = vpop.permute.xlu0 %1573
    %1575 = vrot.lane.b32.xlu0 %v1566, 32
    %v1576 = vpop.permute.xlu0 %1575
    %1577 = vrot.lane.b32.xlu0 %v1567, 32
    %v1578 = vpop.permute.xlu0 %1577
    %1579 = vrot.lane.b32.xlu0 %v1568, 32
    %v1580 = vpop.permute.xlu0 %1579
    %v1585 = vadd.f32 %v1545, %v1574
    %v1586 = vadd.f32 %v1546, %v1576
    %v1587 = vadd.f32 %v1547, %v1578
    %v1588 = vadd.f32 %v1548, %v1580
    %v1589 = vtanh.pop %v1585
    %v1590 = vtanh.pop %v1586
    %v1591 = vtanh.pop %v1587
    %v1592 = vtanh.pop %v1588
    %1597 = vrot.lane.b32.xlu0 %v1589, 64
    %v1598 = vpop.permute.xlu0 %1597
    %1599 = vrot.lane.b32.xlu0 %v1590, 64
    %v1600 = vpop.permute.xlu0 %1599
    %1601 = vrot.lane.b32.xlu0 %v1591, 64
    %v1602 = vpop.permute.xlu0 %1601
    %1603 = vrot.lane.b32.xlu0 %v1592, 64
    %v1604 = vpop.permute.xlu0 %1603
    %v1609 = vmul.f32 %v1483, %v1598
    %v1610 = vmul.f32 %v1498, %v1600
    %v1611 = vmul.f32 %v1513, %v1602
    %v1612 = vmul.f32 %v1528, %v1604
    %v1613 = vpack.c.bf16 %v1609, %v1609
    %v1614 = vpack.c.bf16 %v1610, %v1610
    %v1615 = vpack.c.bf16 %v1611, %v1611
    %v1616 = vpack.c.bf16 %v1612, %v1612
    %v1621 = vunpack.c.l.b16 %v1613
    %v1622 = vunpack.c.l.b16 %v1614
    %v1623 = vunpack.c.l.b16 %v1615
    %v1624 = vunpack.c.l.b16 %v1616
    %v1625 = vrot.slane %v1621, 6
    %v1626 = vrot.slane %v1622, 5
    %v1627 = vsel %vm364, %v1626, %v1625
    %v1628 = vrot.slane %v1623, 4
    %v1629 = vsel %vm367, %v1628, %v1627
    %v1630 = vrot.slane %v1624, 3
    %v1631 = vsel %vm370, %v1630, %v1629
    %v1632 = vpack.c.b16 %v1631, %v1631
    %1633 = vrot.lane.b32.xlu0 %v1632, 32
    %v1634 = vpop.permute.xlu0 %1633
    %v1636 = vsel %vm111, %v1634, 0
    %1638 = vmatpush.bf16.msra.mxu0 0
    %1639 = vmatpush.bf16.msra.mxu0 0
    %1640 = vmatpush.bf16.msra.mxu0 0
    %1641 = vmatpush.bf16.msra.mxu0 0
    %1642 = vmatpush.bf16.msra.mxu0 0
    %1643 = vmatpush.bf16.msra.mxu0 0
    %1644 = vmatpush.bf16.msra.mxu0 %v100
    %1645 = vmatpush.bf16.msra.mxu0 %v99
    %1646 = vmatmul.bf16.gmra.mxu0 %v1636
    %v1647 = vpop.f32.mrf.mxu0
    %v1648 = vadd.f32 0.0, %v1647
    %v1649 = vpop.f32.mrf.mxu0
    %1650 = vdwg.mxu0
    %v1652 = vrot.slane %v1648, 1
    %v1653 = vrot.slane %v1648, 2
    %v1654 = vrot.slane %v1648, 3
    %v1655 = vrot.slane %v1648, 4
    %v1660 = vadd.f32 %v128, %v1652
    %v1661 = vadd.f32 %v130, %v1653
    %v1662 = vadd.f32 %v133, %v1654
    %v1663 = vadd.f32 %v135, %v1655
    %v1664 = vxor.u32 %v1660, 2147483648
    %v1665 = vxor.u32 %v1661, 2147483648
    %v1666 = vxor.u32 %v1662, 2147483648
    %v1667 = vxor.u32 %v1663, 2147483648
    %v1668 = vmul.f32 %v1664, 1.442695
    %v1669 = vpow.pop %v1668
    %v1670 = vmul.f32 %v1665, 1.442695
    %v1671 = vpow.pop %v1670
    %v1672 = vmul.f32 %v1666, 1.442695
    %v1673 = vpow.pop %v1672
    %v1674 = vmul.f32 %v1667, 1.442695
    %v1675 = vpow.pop %v1674
    %v1676 = vadd.f32 %v1669, 1.0
    %v1677 = vadd.f32 %v1671, 1.0
    %v1678 = vadd.f32 %v1673, 1.0
    %v1679 = vadd.f32 %v1675, 1.0
    %v1680 = vrcp.pop %v1676
    %v1681 = vmul.f32 %v1676, %v1680
    %v1682 = vsub.f32 1.0, %v1681
    %v1683 = vmul.f32 %v1680, %v1682
    %v1684 = vadd.f32 %v1680, %v1683
    %vm1685 = vweird.f32 %v1676
    %vm1686 = vweird.f32 %v1680
    %vm1687 = vmor %vm1685, %vm1686
    %v1688 = vsel %vm1687, %v1680, %v1684
    %v1689 = vand.u32 2147483647, %v1676
    %vm1690 = vcmp.eq.f32.partialorder %v1689, 8.507059e+37
    %v1691 = vand.u32 %v1676, 2147483648
    %v1692 = vor.u32 1.1754944e-38, %v1691
    %v1693 = vsel %vm1690, %v1692, %v1688
    %v1694 = vmul.f32 1.0, %v1693
    %v1695 = vrcp.pop %v1677
    %v1696 = vmul.f32 %v1677, %v1695
    %v1697 = vsub.f32 1.0, %v1696
    %v1698 = vmul.f32 %v1695, %v1697
    %v1699 = vadd.f32 %v1695, %v1698
    %vm1700 = vweird.f32 %v1677
    %vm1701 = vweird.f32 %v1695
    %vm1702 = vmor %vm1700, %vm1701
    %v1703 = vsel %vm1702, %v1695, %v1699
    %v1704 = vand.u32 2147483647, %v1677
    %vm1705 = vcmp.eq.f32.partialorder %v1704, 8.507059e+37
    %v1706 = vand.u32 %v1677, 2147483648
    %v1707 = vor.u32 1.1754944e-38, %v1706
    %v1708 = vsel %vm1705, %v1707, %v1703
    %v1709 = vmul.f32 1.0, %v1708
    %v1710 = vrcp.pop %v1678
    %v1711 = vmul.f32 %v1678, %v1710
    %v1712 = vsub.f32 1.0, %v1711
    %v1713 = vmul.f32 %v1710, %v1712
    %v1714 = vadd.f32 %v1710, %v1713
    %vm1715 = vweird.f32 %v1678
    %vm1716 = vweird.f32 %v1710
    %vm1717 = vmor %vm1715, %vm1716
    %v1718 = vsel %vm1717, %v1710, %v1714
    %v1719 = vand.u32 2147483647, %v1678
    %vm1720 = vcmp.eq.f32.partialorder %v1719, 8.507059e+37
    %v1721 = vand.u32 %v1678, 2147483648
    %v1722 = vor.u32 1.1754944e-38, %v1721
    %v1723 = vsel %vm1720, %v1722, %v1718
    %v1724 = vmul.f32 1.0, %v1723
    %v1725 = vrcp.pop %v1679
    %v1726 = vmul.f32 %v1679, %v1725
    %v1727 = vsub.f32 1.0, %v1726
    %v1728 = vmul.f32 %v1725, %v1727
    %v1729 = vadd.f32 %v1725, %v1728
    %vm1730 = vweird.f32 %v1679
    %vm1731 = vweird.f32 %v1725
    %vm1732 = vmor %vm1730, %vm1731
    %v1733 = vsel %vm1732, %v1725, %v1729
    %v1734 = vand.u32 2147483647, %v1679
    %vm1735 = vcmp.eq.f32.partialorder %v1734, 8.507059e+37
    %v1736 = vand.u32 %v1679, 2147483648
    %v1737 = vor.u32 1.1754944e-38, %v1736
    %v1738 = vsel %vm1735, %v1737, %v1733
    %v1739 = vmul.f32 1.0, %v1738
    %v1740 = vtanh.pop %v1660
    %v1741 = vtanh.pop %v1661
    %v1742 = vtanh.pop %v1662
    %v1743 = vtanh.pop %v1663
    %v1748 = vrot.slane %v1585, 7
    %v1749 = vrot.slane %v1586, 7
    %v1750 = vrot.slane %v1587, 7
    %v1751 = vrot.slane %v1588, 7
    %v1756 = vmul.f32 %v1694, %v1748
    %v1757 = vmul.f32 %v1709, %v1749
    %v1758 = vmul.f32 %v1724, %v1750
    %v1759 = vmul.f32 %v1739, %v1751
    %1764 = vrot.lane.b32.xlu0 %v1740, 64
    %v1765 = vpop.permute.xlu0 %1764
    %1766 = vrot.lane.b32.xlu0 %v1741, 64
    %v1767 = vpop.permute.xlu0 %1766
    %1768 = vrot.lane.b32.xlu0 %v1742, 64
    %v1769 = vpop.permute.xlu0 %1768
    %1770 = vrot.lane.b32.xlu0 %v1743, 64
    %v1771 = vpop.permute.xlu0 %1770
    %v1776 = vmul.f32 %v1694, %v1765
    %v1777 = vmul.f32 %v1709, %v1767
    %v1778 = vmul.f32 %v1724, %v1769
    %v1779 = vmul.f32 %v1739, %v1771
    %1784 = vrot.lane.b32.xlu0 %v1776, 32
    %v1785 = vpop.permute.xlu0 %1784
    %1786 = vrot.lane.b32.xlu0 %v1777, 32
    %v1787 = vpop.permute.xlu0 %1786
    %1788 = vrot.lane.b32.xlu0 %v1778, 32
    %v1789 = vpop.permute.xlu0 %1788
    %1790 = vrot.lane.b32.xlu0 %v1779, 32
    %v1791 = vpop.permute.xlu0 %1790
    %v1796 = vadd.f32 %v1756, %v1785
    %v1797 = vadd.f32 %v1757, %v1787
    %v1798 = vadd.f32 %v1758, %v1789
    %v1799 = vadd.f32 %v1759, %v1791
    %v1800 = vtanh.pop %v1796
    %v1801 = vtanh.pop %v1797
    %v1802 = vtanh.pop %v1798
    %v1803 = vtanh.pop %v1799
    %1808 = vrot.lane.b32.xlu0 %v1800, 64
    %v1809 = vpop.permute.xlu0 %1808
    %1810 = vrot.lane.b32.xlu0 %v1801, 64
    %v1811 = vpop.permute.xlu0 %1810
    %1812 = vrot.lane.b32.xlu0 %v1802, 64
    %v1813 = vpop.permute.xlu0 %1812
    %1814 = vrot.lane.b32.xlu0 %v1803, 64
    %v1815 = vpop.permute.xlu0 %1814
    %v1820 = vmul.f32 %v1694, %v1809
    %v1821 = vmul.f32 %v1709, %v1811
    %v1822 = vmul.f32 %v1724, %v1813
    %v1823 = vmul.f32 %v1739, %v1815
    %v1824 = vpack.c.bf16 %v1820, %v1820
    %v1825 = vpack.c.bf16 %v1821, %v1821
    %v1826 = vpack.c.bf16 %v1822, %v1822
    %v1827 = vpack.c.bf16 %v1823, %v1823
    %v1832 = vunpack.c.l.b16 %v1824
    %v1833 = vunpack.c.l.b16 %v1825
    %v1834 = vunpack.c.l.b16 %v1826
    %v1835 = vunpack.c.l.b16 %v1827
    %v1836 = vrot.slane %v1832, 7
    %v1837 = vrot.slane %v1833, 6
    %v1838 = vsel %vm364, %v1837, %v1836
    %v1839 = vrot.slane %v1834, 5
    %v1840 = vsel %vm367, %v1839, %v1838
    %v1841 = vrot.slane %v1835, 4
    %v1842 = vsel %vm370, %v1841, %v1840
    %v1843 = vpack.c.b16 %v1842, %v1842
    %1844 = vrot.lane.b32.xlu0 %v1843, 32
    %v1845 = vpop.permute.xlu0 %1844
    %v1847 = vsel %vm111, %v1845, 0
    %1849 = vmatpush.bf16.msra.mxu0 0
    %1850 = vmatpush.bf16.msra.mxu0 0
    %1851 = vmatpush.bf16.msra.mxu0 0
    %1852 = vmatpush.bf16.msra.mxu0 0
    %1853 = vmatpush.bf16.msra.mxu0 0
    %1854 = vmatpush.bf16.msra.mxu0 0
    %1855 = vmatpush.bf16.msra.mxu0 %v174
    %1856 = vmatpush.bf16.msra.mxu0 %v173
    %1857 = vmatmul.bf16.gmra.mxu0 %v1847
    %v1858 = vpop.f32.mrf.mxu0
    %v1859 = vadd.f32 0.0, %v1858
    %v1860 = vpop.f32.mrf.mxu0
    %1861 = vdwg.mxu0
    %v1862 = vxor.u32 %v1820, 2147483648
    %v1863 = vxor.u32 %v1821, 2147483648
    %v1864 = vxor.u32 %v1822, 2147483648
    %v1865 = vxor.u32 %v1823, 2147483648
    %v1866 = vmul.f32 %v1862, 1.442695
    %v1867 = vpow.pop %v1866
    %v1868 = vmul.f32 %v1863, 1.442695
    %v1869 = vpow.pop %v1868
    %v1870 = vmul.f32 %v1864, 1.442695
    %v1871 = vpow.pop %v1870
    %v1872 = vmul.f32 %v1865, 1.442695
    %v1873 = vpow.pop %v1872
    %v1874 = vadd.f32 %v1867, 1.0
    %v1875 = vadd.f32 %v1869, 1.0
    %v1876 = vadd.f32 %v1871, 1.0
    %v1877 = vadd.f32 %v1873, 1.0
    %v1878 = vrcp.pop %v1874
    %v1879 = vmul.f32 %v1874, %v1878
    %v1880 = vsub.f32 1.0, %v1879
    %v1881 = vmul.f32 %v1878, %v1880
    %v1882 = vadd.f32 %v1878, %v1881
    %vm1883 = vweird.f32 %v1874
    %vm1884 = vweird.f32 %v1878
    %vm1885 = vmor %vm1883, %vm1884
    %v1886 = vsel %vm1885, %v1878, %v1882
    %v1887 = vand.u32 2147483647, %v1874
    %vm1888 = vcmp.eq.f32.partialorder %v1887, 8.507059e+37
    %v1889 = vand.u32 %v1874, 2147483648
    %v1890 = vor.u32 1.1754944e-38, %v1889
    %v1891 = vsel %vm1888, %v1890, %v1886
    %v1892 = vmul.f32 1.0, %v1891
    %v1893 = vrcp.pop %v1875
    %v1894 = vmul.f32 %v1875, %v1893
    %v1895 = vsub.f32 1.0, %v1894
    %v1896 = vmul.f32 %v1893, %v1895
    %v1897 = vadd.f32 %v1893, %v1896
    %vm1898 = vweird.f32 %v1875
    %vm1899 = vweird.f32 %v1893
    %vm1900 = vmor %vm1898, %vm1899
    %v1901 = vsel %vm1900, %v1893, %v1897
    %v1902 = vand.u32 2147483647, %v1875
    %vm1903 = vcmp.eq.f32.partialorder %v1902, 8.507059e+37
    %v1904 = vand.u32 %v1875, 2147483648
    %v1905 = vor.u32 1.1754944e-38, %v1904
    %v1906 = vsel %vm1903, %v1905, %v1901
    %v1907 = vmul.f32 1.0, %v1906
    %v1908 = vrcp.pop %v1876
    %v1909 = vmul.f32 %v1876, %v1908
    %v1910 = vsub.f32 1.0, %v1909
    %v1911 = vmul.f32 %v1908, %v1910
    %v1912 = vadd.f32 %v1908, %v1911
    %vm1913 = vweird.f32 %v1876
    %vm1914 = vweird.f32 %v1908
    %vm1915 = vmor %vm1913, %vm1914
    %v1916 = vsel %vm1915, %v1908, %v1912
    %v1917 = vand.u32 2147483647, %v1876
    %vm1918 = vcmp.eq.f32.partialorder %v1917, 8.507059e+37
    %v1919 = vand.u32 %v1876, 2147483648
    %v1920 = vor.u32 1.1754944e-38, %v1919
    %v1921 = vsel %vm1918, %v1920, %v1916
    %v1922 = vmul.f32 1.0, %v1921
    %v1923 = vrcp.pop %v1877
    %v1924 = vmul.f32 %v1877, %v1923
    %v1925 = vsub.f32 1.0, %v1924
    %v1926 = vmul.f32 %v1923, %v1925
    %v1927 = vadd.f32 %v1923, %v1926
    %vm1928 = vweird.f32 %v1877
    %vm1929 = vweird.f32 %v1923
    %vm1930 = vmor %vm1928, %vm1929
    %v1931 = vsel %vm1930, %v1923, %v1927
    %v1932 = vand.u32 2147483647, %v1877
    %vm1933 = vcmp.eq.f32.partialorder %v1932, 8.507059e+37
    %v1934 = vand.u32 %v1877, 2147483648
    %v1935 = vor.u32 1.1754944e-38, %v1934
    %v1936 = vsel %vm1933, %v1935, %v1931
    %v1937 = vmul.f32 1.0, %v1936
    %v1942 = vrot.slane %v1907, 7
    %v1943 = vrot.slane %v1922, 6
    %v1944 = vsel %vm364, %v1943, %v1942
    %v1945 = vrot.slane %v1937, 5
    %v1946 = vsel %vm367, %v1945, %v1944
    %1947 = vrot.lane.b32.xlu0 %v1892, 32
    %v1948 = vpop.permute.xlu0 %1947
    %1949 = vrot.lane.b32.xlu0 %v1946, 32
    %v1950 = vpop.permute.xlu0 %1949
    %vm1953 = vcmask 261127
    %1954 = vst.msk [vmem:[%s6 - $0x7] sm:$0x80] %vm1953, %v1948
    %vm1955 = vcmask 256000
    %1956 = vst.msk [vmem:[%s6 + $0x1] sm:$0x7] %vm1955, %v1950
    %v1957 = vxor.u32 %v1859, 2147483648
    %v1958 = vmul.f32 %v1957, 1.442695
    %v1959 = vpow.pop %v1958
    %v1960 = vadd.f32 %v1959, 1.0
    %v1961 = vrcp.pop %v1960
    %v1962 = vmul.f32 %v1960, %v1961
    %v1963 = vsub.f32 1.0, %v1962
    %v1964 = vmul.f32 %v1961, %v1963
    %v1965 = vadd.f32 %v1961, %v1964
    %vm1966 = vweird.f32 %v1960
    %vm1967 = vweird.f32 %v1961
    %vm1968 = vmor %vm1966, %vm1967
    %v1969 = vsel %vm1968, %v1961, %v1965
    %v1970 = vand.u32 2147483647, %v1960
    %vm1971 = vcmp.eq.f32.partialorder %v1970, 8.507059e+37
    %v1972 = vand.u32 %v1960, 2147483648
    %v1973 = vor.u32 1.1754944e-38, %v1972
    %v1974 = vsel %vm1971, %v1973, %v1969
    %v1975 = vmul.f32 1.0, %v1974
    %vm1976 = vcmask 27648
    %1977 = vst.msk [vmem:[%s7] sm:$0xf] %vm1976, %v1975
    // Predicated region
    $region42: #{_transition_rotation_impl.1} parent=1 // pred_check
      _
    $region43: #{_transition_rotation_impl.1} parent=1 // pred_check_branch
      %1979 = sbr.rel (0) target = $region45
    $region44: #{_transition_rotation_impl.1} parent=1 // pred_region
      _
    $region45: #{_transition_rotation_impl.1} parent=1 // pred_fallthru
      _
    // Predicated region
    $region46: #{_transition_rotation_impl.1} parent=1 // pred_check
      _
    $region47: #{_transition_rotation_impl.1} parent=1 // pred_check_branch
      %1981 = sbr.rel (0) target = $region49
    $region48: #{_transition_rotation_impl.1} parent=1 // pred_region
      _
    $region49: #{_transition_rotation_impl.1} parent=1 // pred_fallthru
      _
    // Predicated region
    $region50: #{_transition_rotation_impl.1} parent=1 // pred_check
      _
    $region51: #{_transition_rotation_impl.1} parent=1 // pred_check_branch
      %1983 = sbr.rel (0) target = $region53
    $region52: #{_transition_rotation_impl.1} parent=1 // pred_region
      _
    $region53: #{_transition_rotation_impl.1} parent=1 // pred_fallthru
      _
    // Predicated region
    $region54: #{_transition_rotation_impl.1} parent=1 // pred_check
      _
    $region55: #{_transition_rotation_impl.1} parent=1 // pred_check_branch
      %1985 = sbr.rel (0) target = $region57
    $region56: #{_transition_rotation_impl.1} parent=1 // pred_region
      _
    $region57: #{_transition_rotation_impl.1} parent=1 // pred_fallthru
      _
    %1986 = vsyncpa [#allocation3], 1
    %1987 = vsyncpa [#allocation5], 1
    %1988 = vsyncpa [#allocation8], 1

</llo_original>
